<compile_context>
chip_gen: v7x
topology: tpu7x:2x2x1
jax: 0.10.0
libtpu: 0.0.40
codegen_flags: <defaults>
</compile_context>

<pallas_src>
import functools
import math

import jax
import jax.numpy as jnp
from jax.experimental import pallas as pl
from jax.experimental.pallas import tpu as pltpu

LANE = 128
SUBLANE = 8  # f32 sublane width


# --------------------------------------------------------------------------
# Fused kernel: num_layers LSTM layers -> ReLU -> fc1, grid=(1,), everything
# resident in VMEM. Row t*B_pad + b of the flattened slabs is (time t, batch b).
# --------------------------------------------------------------------------
def fused_lstm_fc_kernel(*refs, seq_len, batch_pad, hidden, num_layers):
    """refs = [x,
               (w_ih_t, w_hh_t, b) * num_layers,
               w_fc_t_pad, b_fc_pad,
               out,
               gates_scr, hid_scr]"""
    H = hidden
    nw = 3 * num_layers
    x_ref = refs[0]
    layer_refs = refs[1:1 + nw]
    w_fc_ref = refs[1 + nw]
    b_fc_ref = refs[2 + nw]
    out_ref = refs[3 + nw]
    gates_scr = refs[4 + nw]   # (S*B_pad, 4H): staged input projection
    hid_scr = refs[5 + nw]     # (S*B_pad, H):  inter-layer activations

    for layer in range(num_layers):
        w_ih_ref = layer_refs[3 * layer + 0]
        w_hh_ref = layer_refs[3 * layer + 1]
        b_ref = layer_refs[3 * layer + 2]

        # Hoisted input projection for the whole layer: one big MXU matmul with
        # the combined (g-prescaled) bias folded in, staged into VMEM scratch so
        # per-step access is an aligned load rather than a long-lived SSA slab.
        layer_in = x_ref[...] if layer == 0 else hid_scr[...]
        gates_scr[...] = (
            jnp.dot(layer_in, w_ih_ref[...], preferred_element_type=jnp.float32)
            + b_ref[...]
        )
        w_hh = w_hh_ref[...]

        h = jnp.zeros((batch_pad, H), jnp.float32)
        c = jnp.zeros((batch_pad, H), jnp.float32)

        # Serial recurrence; seq_len is small and static here so a full unroll
        # is right. For large S, switch to lax.fori_loop(unroll=k) plus a
        # time-chunked grid carrying h/c in scratch (v7x VMEM ceiling).
        for t in range(seq_len):
            r0 = t * batch_pad  # multiple of 8 -> aligned sublane slice
            gates = gates_scr[r0:r0 + batch_pad, :] + jnp.dot(
                h, w_hh, preferred_element_type=jnp.float32)
            sig = jax.nn.sigmoid(gates)              # single EUP pass, all gates
            i_g = sig[:, 0 * H:1 * H]
            f_g = sig[:, 1 * H:2 * H]
            g_g = 2.0 * sig[:, 2 * H:3 * H] - 1.0    # tanh(original g pre-act)
            o_g = sig[:, 3 * H:4 * H]
            c = f_g * c + i_g * g_g
            h = o_g * jnp.tanh(c)
            hid_scr[r0:r0 + batch_pad, :] = h        # aligned full-sublane store

    # Fused ReLU + Linear over the resident hidden-state slab; output lane dim
    # is padded to 128 so the single HBM writeback is lane-dense.
    acts = jnp.maximum(hid_scr[...], 0.0)
    out_ref[...] = (
        jnp.dot(acts, w_fc_ref[...], preferred_element_type=jnp.float32)
        + b_fc_ref[...]
    )


# --------------------------------------------------------------------------
# Wrapper: one pallas_call for the whole model.
# --------------------------------------------------------------------------
def fused_lstm_fc(x2d, layer_params, w_fc_t_pad, b_fc_pad, *,
                  seq_len, batch_pad, hidden):
    """x2d: (S*B_pad, Din). layer_params[l] has w_ih_t (Din_l,4H), w_hh_t (H,4H),
    b (1,4H). w_fc_t_pad: (H, C_pad), b_fc_pad: (1, C_pad)."""
    N, _ = x2d.shape
    num_layers = len(layer_params)
    C_pad = w_fc_t_pad.shape[1]

    in_arrays = [x2d]
    for p in layer_params:
        in_arrays += [p["w_ih_t"], p["w_hh_t"], p["b"]]
    in_arrays += [w_fc_t_pad, b_fc_pad]

    # All inputs are full-block resident (grid=(1,)); every array is 2D.
    in_specs = [pl.BlockSpec(a.shape, lambda i: (0, 0)) for a in in_arrays]

    kernel = functools.partial(
        fused_lstm_fc_kernel, seq_len=seq_len, batch_pad=batch_pad,
        hidden=hidden, num_layers=num_layers)

    return pl.pallas_call(
        kernel,
        out_shape=jax.ShapeDtypeStruct((N, C_pad), jnp.float32),
        grid_spec=pltpu.PrefetchScalarGridSpec(
            num_scalar_prefetch=0,
            grid=(1,),
            in_specs=in_specs,
            out_specs=pl.BlockSpec((N, C_pad), lambda i: (0, 0)),
            scratch_shapes=[
                pltpu.VMEM((N, 4 * hidden), jnp.float32),  # gates slab
                pltpu.VMEM((N, hidden), jnp.float32),      # hidden-state slab
            ],
        ),
        compiler_params=pltpu.CompilerParams(
            dimension_semantics=("arbitrary",),  # recurrence is sequential
        ),
    )(*in_arrays)


# --------------------------------------------------------------------------
# Parameter init (PyTorch-style uniform) + kernel-friendly packing.
# --------------------------------------------------------------------------
def init_params(key, input_size, hidden_size, num_layers, num_classes):
    H = hidden_size
    k = 1.0 / math.sqrt(H)
    raw = {"lstm": [], "fc": None}
    packed = {"lstm": [], "fc": None}
    # Pre-scale the g-gate (2H:3H) weight columns and bias by 2 so the kernel
    # can use a single sigmoid over all gates (tanh(x) = 2*sigmoid(2x) - 1).
    gate_scale = jnp.ones((4 * H,), jnp.float32).at[2 * H:3 * H].set(2.0)

    for layer in range(num_layers):
        in_sz = input_size if layer == 0 else H
        key, k1, k2, k3, k4 = jax.random.split(key, 5)
        w_ih = jax.random.uniform(k1, (4 * H, in_sz), jnp.float32, -k, k)
        w_hh = jax.random.uniform(k2, (4 * H, H), jnp.float32, -k, k)
        b_ih = jax.random.uniform(k3, (4 * H,), jnp.float32, -k, k)
        b_hh = jax.random.uniform(k4, (4 * H,), jnp.float32, -k, k)
        raw["lstm"].append({"w_ih": w_ih, "w_hh": w_hh, "b_ih": b_ih, "b_hh": b_hh})
        packed["lstm"].append({
            "w_ih_t": w_ih.T * gate_scale[None, :],          # (in_sz, 4H)
            "w_hh_t": w_hh.T * gate_scale[None, :],          # (H, 4H)
            "b": ((b_ih + b_hh) * gate_scale)[None, :],      # (1, 4H)
        })

    key, k1, k2 = jax.random.split(key, 3)
    w_fc = jax.random.uniform(k1, (num_classes, H), jnp.float32, -k, k)
    b_fc = jax.random.uniform(k2, (num_classes,), jnp.float32, -k, k)
    raw["fc"] = {"w": w_fc, "b": b_fc}

    c_pad = LANE * ((num_classes + LANE - 1) // LANE)        # lane-dense output
    w_fc_t_pad = jnp.zeros((H, c_pad), jnp.float32).at[:, :num_classes].set(w_fc.T)
    b_fc_pad = jnp.zeros((1, c_pad), jnp.float32).at[0, :num_classes].set(b_fc)
    packed["fc"] = {"w_t_pad": w_fc_t_pad, "b_pad": b_fc_pad}
    return packed, raw


# --------------------------------------------------------------------------
# Model: one fused pallas_call; wrapper only pads batch/lanes and slices back.
# --------------------------------------------------------------------------
@functools.partial(jax.jit, static_argnames=("num_classes",))
def lstm_model(x, params, *, num_classes):
    S, B, Din = x.shape
    H = params["lstm"][0]["w_hh_t"].shape[0]
    B_pad = SUBLANE * ((B + SUBLANE - 1) // SUBLANE)
    # Zero-pad batch to the sublane width; padded rows compute finite garbage
    # and are sliced off below.
    x_pad = jnp.zeros((S, B_pad, Din), jnp.float32).at[:, :B, :].set(x)
    x2d = x_pad.reshape(S * B_pad, Din)  # time-major flatten: row t*B_pad + b
    out2d = fused_lstm_fc(
        x2d, params["lstm"], params["fc"]["w_t_pad"], params["fc"]["b_pad"],
        seq_len=S, batch_pad=B_pad, hidden=H)
    return out2d.reshape(S, B_pad, -1)[:, :B, :num_classes]


# --------------------------------------------------------------------------
# Pure-JAX reference (standard LSTM math, i/f/g/o gate order) for validation.
# --------------------------------------------------------------------------
def lstm_reference(x, raw):
    h = x
    for lp in raw["lstm"]:
        w_ih, w_hh = lp["w_ih"], lp["w_hh"]
        bias = lp["b_ih"] + lp["b_hh"]
        H = w_hh.shape[1]

        def step(carry, x_t, w_ih=w_ih, w_hh=w_hh, bias=bias, H=H):
            hh, cc = carry
            gates = x_t @ w_ih.T + hh @ w_hh.T + bias
            i = jax.nn.sigmoid(gates[:, 0 * H:1 * H])
            f = jax.nn.sigmoid(gates[:, 1 * H:2 * H])
            g = jnp.tanh(gates[:, 2 * H:3 * H])
            o = jax.nn.sigmoid(gates[:, 3 * H:4 * H])
            cc = f * cc + i * g
            hh = o * jnp.tanh(cc)
            return (hh, cc), hh

        B = h.shape[1]
        init = (jnp.zeros((B, H), jnp.float32), jnp.zeros((B, H), jnp.float32))
        _, h = jax.lax.scan(step, init, h)
    h = jnp.maximum(h, 0.0)
    return h @ raw["fc"]["w"].T + raw["fc"]["b"]


if __name__ == "__main__":
    seq_len = 8
    batch = 2
    input_size = 16
    hidden_size = 32
    num_layers = 2
    num_classes = 10

    key = jax.random.PRNGKey(0)
    key, xk = jax.random.split(key)
    x = jax.random.normal(xk, (seq_len, batch, input_size), jnp.float32)

    packed, raw = init_params(key, input_size, hidden_size, num_layers,
                              num_classes)

    out = lstm_model(x, packed, num_classes=num_classes)
    jax.block_until_ready(out)

    assert out.shape == (seq_len, batch, num_classes), out.shape
    assert bool(jnp.all(jnp.isfinite(out)))

    # Correctness check vs. pure-JAX reference (single-sigmoid trick is exact
    # math; tolerance covers f32 MXU rounding differences).
    with jax.default_matmul_precision("float32"):
        ref = lstm_reference(x, raw)
    err = float(jnp.max(jnp.abs(out - ref)))
    assert err < 2e-3, f"max abs error vs reference: {err}"

    print("KERNEL_OK")
</pallas_src>

<mosaic_0001>
module attributes {stable_mosaic.version = 11 : i64} {
  func.func @fused_lstm_fc_kernel(%arg0: i32, %arg1: memref<64x16xf32, #tpu.memory_space<vmem>>, %arg2: memref<16x128xf32, #tpu.memory_space<vmem>>, %arg3: memref<32x128xf32, #tpu.memory_space<vmem>>, %arg4: memref<1x128xf32, #tpu.memory_space<vmem>>, %arg5: memref<32x128xf32, #tpu.memory_space<vmem>>, %arg6: memref<32x128xf32, #tpu.memory_space<vmem>>, %arg7: memref<1x128xf32, #tpu.memory_space<vmem>>, %arg8: memref<32x128xf32, #tpu.memory_space<vmem>>, %arg9: memref<1x128xf32, #tpu.memory_space<vmem>>, %arg10: memref<64x128xf32, #tpu.memory_space<vmem>>, %arg11: memref<64x128xf32, #tpu.memory_space<vmem>>, %arg12: memref<64x32xf32, #tpu.memory_space<vmem>>) attributes {dimension_semantics = [#tpu.dimension_semantics<arbitrary>], iteration_bounds = array<i64: 1>, scalar_prefetch = 0 : i64, scratch_operands = 2 : i64, tpu.core_type = #tpu.core_type<tc>, window_params = [{pipeline_mode = #tpu.pipeline_mode<synchronous>, transform_indices = @transform_0, window_bounds = array<i64: 64, 16>}, {pipeline_mode = #tpu.pipeline_mode<synchronous>, transform_indices = @transform_1, window_bounds = array<i64: 16, 128>}, {pipeline_mode = #tpu.pipeline_mode<synchronous>, transform_indices = @transform_2, window_bounds = array<i64: 32, 128>}, {pipeline_mode = #tpu.pipeline_mode<synchronous>, transform_indices = @transform_3, window_bounds = array<i64: 1, 128>}, {pipeline_mode = #tpu.pipeline_mode<synchronous>, transform_indices = @transform_4, window_bounds = array<i64: 32, 128>}, {pipeline_mode = #tpu.pipeline_mode<synchronous>, transform_indices = @transform_5, window_bounds = array<i64: 32, 128>}, {pipeline_mode = #tpu.pipeline_mode<synchronous>, transform_indices = @transform_6, window_bounds = array<i64: 1, 128>}, {pipeline_mode = #tpu.pipeline_mode<synchronous>, transform_indices = @transform_7, window_bounds = array<i64: 32, 128>}, {pipeline_mode = #tpu.pipeline_mode<synchronous>, transform_indices = @transform_8, window_bounds = array<i64: 1, 128>}, {pipeline_mode = #tpu.pipeline_mode<synchronous>, transform_indices = @transform_9, window_bounds = array<i64: 64, 128>}]} {
    %c0 = arith.constant 0 : index
    %c0_0 = arith.constant 0 : index
    %0 = vector.load %arg1[%c0, %c0_0] : memref<64x16xf32, #tpu.memory_space<vmem>>, vector<64x16xf32>
    %c0_1 = arith.constant 0 : index
    %c0_2 = arith.constant 0 : index
    %1 = vector.load %arg2[%c0_1, %c0_2] : memref<16x128xf32, #tpu.memory_space<vmem>>, vector<16x128xf32>
    %cst = arith.constant dense<0.000000e+00> : vector<64x128xf32>
    %2 = tpu.matmul %0, %1, %cst {dimension_numbers = #tpu.dot_dimension_numbers<[1], [0], [0], [1], [0, 0, 1, 1], [], []>} : vector<64x16xf32>, vector<16x128xf32>, vector<64x128xf32> -> vector<64x128xf32>
    %c0_3 = arith.constant 0 : index
    %c0_4 = arith.constant 0 : index
    %3 = vector.load %arg4[%c0_3, %c0_4] : memref<1x128xf32, #tpu.memory_space<vmem>>, vector<1x128xf32>
    %4 = vector.broadcast %3 : vector<1x128xf32> to vector<64x128xf32>
    %5 = arith.addf %2, %4 : vector<64x128xf32>
    %c0_5 = arith.constant 0 : index
    %c0_6 = arith.constant 0 : index
    %6 = vector.load %arg11[%c0_5, %c0_6] : memref<64x128xf32, #tpu.memory_space<vmem>>, vector<64x128xf32>
    tpu.vector_store %arg11[%c0_5, %c0_6], %5 {strides = array<i32>} : memref<64x128xf32, #tpu.memory_space<vmem>>, vector<64x128xf32>,
    %c0_7 = arith.constant 0 : index
    %c0_8 = arith.constant 0 : index
    %7 = vector.load %arg3[%c0_7, %c0_8] : memref<32x128xf32, #tpu.memory_space<vmem>>, vector<32x128xf32>
    %cst_9 = arith.constant 0.000000e+00 : f32
    %8 = vector.broadcast %cst_9 : f32 to vector<8x32xf32>
    %cst_10 = arith.constant 0.000000e+00 : f32
    %9 = vector.broadcast %cst_10 : f32 to vector<8x32xf32>
    %c0_11 = arith.constant 0 : index
    %c0_12 = arith.constant 0 : index
    %10 = vector.load %arg11[%c0_11, %c0_12] : memref<64x128xf32, #tpu.memory_space<vmem>>, vector<8x128xf32>
    %cst_13 = arith.constant dense<0.000000e+00> : vector<8x128xf32>
    %11 = tpu.matmul %8, %7, %cst_13 {dimension_numbers = #tpu.dot_dimension_numbers<[1], [0], [0], [1], [0, 0, 1, 1], [], []>} : vector<8x32xf32>, vector<32x128xf32>, vector<8x128xf32> -> vector<8x128xf32>
    %12 = arith.addf %10, %11 : vector<8x128xf32>
    %13 = arith.negf %12 : vector<8x128xf32>
    %14 = math.exp %13 : vector<8x128xf32>
    %cst_14 = arith.constant 1.000000e+00 : f32
    %15 = vector.broadcast %cst_14 : f32 to vector<8x128xf32>
    %16 = arith.addf %15, %14 : vector<8x128xf32>
    %17 = arith.divf %15, %16 : vector<8x128xf32>
    %18 = vector.extract_strided_slice %17 {offsets = [0, 0], sizes = [8, 32], strides = [1, 1]} : vector<8x128xf32> to vector<8x32xf32>
    %19 = vector.extract_strided_slice %17 {offsets = [0, 32], sizes = [8, 32], strides = [1, 1]} : vector<8x128xf32> to vector<8x32xf32>
    %20 = vector.extract_strided_slice %17 {offsets = [0, 64], sizes = [8, 32], strides = [1, 1]} : vector<8x128xf32> to vector<8x32xf32>
    %cst_15 = arith.constant 2.000000e+00 : f32
    %21 = vector.broadcast %cst_15 : f32 to vector<8x32xf32>
    %22 = arith.mulf %21, %20 : vector<8x32xf32>
    %cst_16 = arith.constant 1.000000e+00 : f32
    %23 = vector.broadcast %cst_16 : f32 to vector<8x32xf32>
    %24 = arith.subf %22, %23 : vector<8x32xf32>
    %25 = vector.extract_strided_slice %17 {offsets = [0, 96], sizes = [8, 32], strides = [1, 1]} : vector<8x128xf32> to vector<8x32xf32>
    %26 = arith.mulf %19, %9 : vector<8x32xf32>
    %27 = arith.mulf %18, %24 : vector<8x32xf32>
    %28 = arith.addf %26, %27 : vector<8x32xf32>
    %29 = math.tanh %28 : vector<8x32xf32>
    %30 = arith.mulf %25, %29 : vector<8x32xf32>
    %c0_17 = arith.constant 0 : index
    %c0_18 = arith.constant 0 : index
    %31 = vector.load %arg12[%c0_17, %c0_18] : memref<64x32xf32, #tpu.memory_space<vmem>>, vector<8x32xf32>
    tpu.vector_store %arg12[%c0_17, %c0_18], %30 {strides = array<i32>} : memref<64x32xf32, #tpu.memory_space<vmem>>, vector<8x32xf32>,
    %c8 = arith.constant 8 : index
    %c0_19 = arith.constant 0 : index
    %32 = vector.load %arg11[%c8, %c0_19] : memref<64x128xf32, #tpu.memory_space<vmem>>, vector<8x128xf32>
    %cst_20 = arith.constant dense<0.000000e+00> : vector<8x128xf32>
    %33 = tpu.matmul %30, %7, %cst_20 {dimension_numbers = #tpu.dot_dimension_numbers<[1], [0], [0], [1], [0, 0, 1, 1], [], []>} : vector<8x32xf32>, vector<32x128xf32>, vector<8x128xf32> -> vector<8x128xf32>
    %34 = arith.addf %32, %33 : vector<8x128xf32>
    %35 = arith.negf %34 : vector<8x128xf32>
    %36 = math.exp %35 : vector<8x128xf32>
    %cst_21 = arith.constant 1.000000e+00 : f32
    %37 = vector.broadcast %cst_21 : f32 to vector<8x128xf32>
    %38 = arith.addf %37, %36 : vector<8x128xf32>
    %39 = arith.divf %37, %38 : vector<8x128xf32>
    %40 = vector.extract_strided_slice %39 {offsets = [0, 0], sizes = [8, 32], strides = [1, 1]} : vector<8x128xf32> to vector<8x32xf32>
    %41 = vector.extract_strided_slice %39 {offsets = [0, 32], sizes = [8, 32], strides = [1, 1]} : vector<8x128xf32> to vector<8x32xf32>
    %42 = vector.extract_strided_slice %39 {offsets = [0, 64], sizes = [8, 32], strides = [1, 1]} : vector<8x128xf32> to vector<8x32xf32>
    %cst_22 = arith.constant 2.000000e+00 : f32
    %43 = vector.broadcast %cst_22 : f32 to vector<8x32xf32>
    %44 = arith.mulf %43, %42 : vector<8x32xf32>
    %cst_23 = arith.constant 1.000000e+00 : f32
    %45 = vector.broadcast %cst_23 : f32 to vector<8x32xf32>
    %46 = arith.subf %44, %45 : vector<8x32xf32>
    %47 = vector.extract_strided_slice %39 {offsets = [0, 96], sizes = [8, 32], strides = [1, 1]} : vector<8x128xf32> to vector<8x32xf32>
    %48 = arith.mulf %41, %28 : vector<8x32xf32>
    %49 = arith.mulf %40, %46 : vector<8x32xf32>
    %50 = arith.addf %48, %49 : vector<8x32xf32>
    %51 = math.tanh %50 : vector<8x32xf32>
    %52 = arith.mulf %47, %51 : vector<8x32xf32>
    %c8_24 = arith.constant 8 : index
    %c0_25 = arith.constant 0 : index
    %53 = vector.load %arg12[%c8_24, %c0_25] : memref<64x32xf32, #tpu.memory_space<vmem>>, vector<8x32xf32>
    tpu.vector_store %arg12[%c8_24, %c0_25], %52 {strides = array<i32>} : memref<64x32xf32, #tpu.memory_space<vmem>>, vector<8x32xf32>,
    %c16 = arith.constant 16 : index
    %c0_26 = arith.constant 0 : index
    %54 = vector.load %arg11[%c16, %c0_26] : memref<64x128xf32, #tpu.memory_space<vmem>>, vector<8x128xf32>
    %cst_27 = arith.constant dense<0.000000e+00> : vector<8x128xf32>
    %55 = tpu.matmul %52, %7, %cst_27 {dimension_numbers = #tpu.dot_dimension_numbers<[1], [0], [0], [1], [0, 0, 1, 1], [], []>} : vector<8x32xf32>, vector<32x128xf32>, vector<8x128xf32> -> vector<8x128xf32>
    %56 = arith.addf %54, %55 : vector<8x128xf32>
    %57 = arith.negf %56 : vector<8x128xf32>
    %58 = math.exp %57 : vector<8x128xf32>
    %cst_28 = arith.constant 1.000000e+00 : f32
    %59 = vector.broadcast %cst_28 : f32 to vector<8x128xf32>
    %60 = arith.addf %59, %58 : vector<8x128xf32>
    %61 = arith.divf %59, %60 : vector<8x128xf32>
    %62 = vector.extract_strided_slice %61 {offsets = [0, 0], sizes = [8, 32], strides = [1, 1]} : vector<8x128xf32> to vector<8x32xf32>
    %63 = vector.extract_strided_slice %61 {offsets = [0, 32], sizes = [8, 32], strides = [1, 1]} : vector<8x128xf32> to vector<8x32xf32>
    %64 = vector.extract_strided_slice %61 {offsets = [0, 64], sizes = [8, 32], strides = [1, 1]} : vector<8x128xf32> to vector<8x32xf32>
    %cst_29 = arith.constant 2.000000e+00 : f32
    %65 = vector.broadcast %cst_29 : f32 to vector<8x32xf32>
    %66 = arith.mulf %65, %64 : vector<8x32xf32>
    %cst_30 = arith.constant 1.000000e+00 : f32
    %67 = vector.broadcast %cst_30 : f32 to vector<8x32xf32>
    %68 = arith.subf %66, %67 : vector<8x32xf32>
    %69 = vector.extract_strided_slice %61 {offsets = [0, 96], sizes = [8, 32], strides = [1, 1]} : vector<8x128xf32> to vector<8x32xf32>
    %70 = arith.mulf %63, %50 : vector<8x32xf32>
    %71 = arith.mulf %62, %68 : vector<8x32xf32>
    %72 = arith.addf %70, %71 : vector<8x32xf32>
    %73 = math.tanh %72 : vector<8x32xf32>
    %74 = arith.mulf %69, %73 : vector<8x32xf32>
    %c16_31 = arith.constant 16 : index
    %c0_32 = arith.constant 0 : index
    %75 = vector.load %arg12[%c16_31, %c0_32] : memref<64x32xf32, #tpu.memory_space<vmem>>, vector<8x32xf32>
    tpu.vector_store %arg12[%c16_31, %c0_32], %74 {strides = array<i32>} : memref<64x32xf32, #tpu.memory_space<vmem>>, vector<8x32xf32>,
    %c24 = arith.constant 24 : index
    %c0_33 = arith.constant 0 : index
    %76 = vector.load %arg11[%c24, %c0_33] : memref<64x128xf32, #tpu.memory_space<vmem>>, vector<8x128xf32>
    %cst_34 = arith.constant dense<0.000000e+00> : vector<8x128xf32>
    %77 = tpu.matmul %74, %7, %cst_34 {dimension_numbers = #tpu.dot_dimension_numbers<[1], [0], [0], [1], [0, 0, 1, 1], [], []>} : vector<8x32xf32>, vector<32x128xf32>, vector<8x128xf32> -> vector<8x128xf32>
    %78 = arith.addf %76, %77 : vector<8x128xf32>
    %79 = arith.negf %78 : vector<8x128xf32>
    %80 = math.exp %79 : vector<8x128xf32>
    %cst_35 = arith.constant 1.000000e+00 : f32
    %81 = vector.broadcast %cst_35 : f32 to vector<8x128xf32>
    %82 = arith.addf %81, %80 : vector<8x128xf32>
    %83 = arith.divf %81, %82 : vector<8x128xf32>
    %84 = vector.extract_strided_slice %83 {offsets = [0, 0], sizes = [8, 32], strides = [1, 1]} : vector<8x128xf32> to vector<8x32xf32>
    %85 = vector.extract_strided_slice %83 {offsets = [0, 32], sizes = [8, 32], strides = [1, 1]} : vector<8x128xf32> to vector<8x32xf32>
    %86 = vector.extract_strided_slice %83 {offsets = [0, 64], sizes = [8, 32], strides = [1, 1]} : vector<8x128xf32> to vector<8x32xf32>
    %cst_36 = arith.constant 2.000000e+00 : f32
    %87 = vector.broadcast %cst_36 : f32 to vector<8x32xf32>
    %88 = arith.mulf %87, %86 : vector<8x32xf32>
    %cst_37 = arith.constant 1.000000e+00 : f32
    %89 = vector.broadcast %cst_37 : f32 to vector<8x32xf32>
    %90 = arith.subf %88, %89 : vector<8x32xf32>
    %91 = vector.extract_strided_slice %83 {offsets = [0, 96], sizes = [8, 32], strides = [1, 1]} : vector<8x128xf32> to vector<8x32xf32>
    %92 = arith.mulf %85, %72 : vector<8x32xf32>
    %93 = arith.mulf %84, %90 : vector<8x32xf32>
    %94 = arith.addf %92, %93 : vector<8x32xf32>
    %95 = math.tanh %94 : vector<8x32xf32>
    %96 = arith.mulf %91, %95 : vector<8x32xf32>
    %c24_38 = arith.constant 24 : index
    %c0_39 = arith.constant 0 : index
    %97 = vector.load %arg12[%c24_38, %c0_39] : memref<64x32xf32, #tpu.memory_space<vmem>>, vector<8x32xf32>
    tpu.vector_store %arg12[%c24_38, %c0_39], %96 {strides = array<i32>} : memref<64x32xf32, #tpu.memory_space<vmem>>, vector<8x32xf32>,
    %c32 = arith.constant 32 : index
    %c0_40 = arith.constant 0 : index
    %98 = vector.load %arg11[%c32, %c0_40] : memref<64x128xf32, #tpu.memory_space<vmem>>, vector<8x128xf32>
    %cst_41 = arith.constant dense<0.000000e+00> : vector<8x128xf32>
    %99 = tpu.matmul %96, %7, %cst_41 {dimension_numbers = #tpu.dot_dimension_numbers<[1], [0], [0], [1], [0, 0, 1, 1], [], []>} : vector<8x32xf32>, vector<32x128xf32>, vector<8x128xf32> -> vector<8x128xf32>
    %100 = arith.addf %98, %99 : vector<8x128xf32>
    %101 = arith.negf %100 : vector<8x128xf32>
    %102 = math.exp %101 : vector<8x128xf32>
    %cst_42 = arith.constant 1.000000e+00 : f32
    %103 = vector.broadcast %cst_42 : f32 to vector<8x128xf32>
    %104 = arith.addf %103, %102 : vector<8x128xf32>
    %105 = arith.divf %103, %104 : vector<8x128xf32>
    %106 = vector.extract_strided_slice %105 {offsets = [0, 0], sizes = [8, 32], strides = [1, 1]} : vector<8x128xf32> to vector<8x32xf32>
    %107 = vector.extract_strided_slice %105 {offsets = [0, 32], sizes = [8, 32], strides = [1, 1]} : vector<8x128xf32> to vector<8x32xf32>
    %108 = vector.extract_strided_slice %105 {offsets = [0, 64], sizes = [8, 32], strides = [1, 1]} : vector<8x128xf32> to vector<8x32xf32>
    %cst_43 = arith.constant 2.000000e+00 : f32
    %109 = vector.broadcast %cst_43 : f32 to vector<8x32xf32>
    %110 = arith.mulf %109, %108 : vector<8x32xf32>
    %cst_44 = arith.constant 1.000000e+00 : f32
    %111 = vector.broadcast %cst_44 : f32 to vector<8x32xf32>
    %112 = arith.subf %110, %111 : vector<8x32xf32>
    %113 = vector.extract_strided_slice %105 {offsets = [0, 96], sizes = [8, 32], strides = [1, 1]} : vector<8x128xf32> to vector<8x32xf32>
    %114 = arith.mulf %107, %94 : vector<8x32xf32>
    %115 = arith.mulf %106, %112 : vector<8x32xf32>
    %116 = arith.addf %114, %115 : vector<8x32xf32>
    %117 = math.tanh %116 : vector<8x32xf32>
    %118 = arith.mulf %113, %117 : vector<8x32xf32>
    %c32_45 = arith.constant 32 : index
    %c0_46 = arith.constant 0 : index
    %119 = vector.load %arg12[%c32_45, %c0_46] : memref<64x32xf32, #tpu.memory_space<vmem>>, vector<8x32xf32>
    tpu.vector_store %arg12[%c32_45, %c0_46], %118 {strides = array<i32>} : memref<64x32xf32, #tpu.memory_space<vmem>>, vector<8x32xf32>,
    %c40 = arith.constant 40 : index
    %c0_47 = arith.constant 0 : index
    %120 = vector.load %arg11[%c40, %c0_47] : memref<64x128xf32, #tpu.memory_space<vmem>>, vector<8x128xf32>
    %cst_48 = arith.constant dense<0.000000e+00> : vector<8x128xf32>
    %121 = tpu.matmul %118, %7, %cst_48 {dimension_numbers = #tpu.dot_dimension_numbers<[1], [0], [0], [1], [0, 0, 1, 1], [], []>} : vector<8x32xf32>, vector<32x128xf32>, vector<8x128xf32> -> vector<8x128xf32>
    %122 = arith.addf %120, %121 : vector<8x128xf32>
    %123 = arith.negf %122 : vector<8x128xf32>
    %124 = math.exp %123 : vector<8x128xf32>
    %cst_49 = arith.constant 1.000000e+00 : f32
    %125 = vector.broadcast %cst_49 : f32 to vector<8x128xf32>
    %126 = arith.addf %125, %124 : vector<8x128xf32>
    %127 = arith.divf %125, %126 : vector<8x128xf32>
    %128 = vector.extract_strided_slice %127 {offsets = [0, 0], sizes = [8, 32], strides = [1, 1]} : vector<8x128xf32> to vector<8x32xf32>
    %129 = vector.extract_strided_slice %127 {offsets = [0, 32], sizes = [8, 32], strides = [1, 1]} : vector<8x128xf32> to vector<8x32xf32>
    %130 = vector.extract_strided_slice %127 {offsets = [0, 64], sizes = [8, 32], strides = [1, 1]} : vector<8x128xf32> to vector<8x32xf32>
    %cst_50 = arith.constant 2.000000e+00 : f32
    %131 = vector.broadcast %cst_50 : f32 to vector<8x32xf32>
    %132 = arith.mulf %131, %130 : vector<8x32xf32>
    %cst_51 = arith.constant 1.000000e+00 : f32
    %133 = vector.broadcast %cst_51 : f32 to vector<8x32xf32>
    %134 = arith.subf %132, %133 : vector<8x32xf32>
    %135 = vector.extract_strided_slice %127 {offsets = [0, 96], sizes = [8, 32], strides = [1, 1]} : vector<8x128xf32> to vector<8x32xf32>
    %136 = arith.mulf %129, %116 : vector<8x32xf32>
    %137 = arith.mulf %128, %134 : vector<8x32xf32>
    %138 = arith.addf %136, %137 : vector<8x32xf32>
    %139 = math.tanh %138 : vector<8x32xf32>
    %140 = arith.mulf %135, %139 : vector<8x32xf32>
    %c40_52 = arith.constant 40 : index
    %c0_53 = arith.constant 0 : index
    %141 = vector.load %arg12[%c40_52, %c0_53] : memref<64x32xf32, #tpu.memory_space<vmem>>, vector<8x32xf32>
    tpu.vector_store %arg12[%c40_52, %c0_53], %140 {strides = array<i32>} : memref<64x32xf32, #tpu.memory_space<vmem>>, vector<8x32xf32>,
    %c48 = arith.constant 48 : index
    %c0_54 = arith.constant 0 : index
    %142 = vector.load %arg11[%c48, %c0_54] : memref<64x128xf32, #tpu.memory_space<vmem>>, vector<8x128xf32>
    %cst_55 = arith.constant dense<0.000000e+00> : vector<8x128xf32>
    %143 = tpu.matmul %140, %7, %cst_55 {dimension_numbers = #tpu.dot_dimension_numbers<[1], [0], [0], [1], [0, 0, 1, 1], [], []>} : vector<8x32xf32>, vector<32x128xf32>, vector<8x128xf32> -> vector<8x128xf32>
    %144 = arith.addf %142, %143 : vector<8x128xf32>
    %145 = arith.negf %144 : vector<8x128xf32>
    %146 = math.exp %145 : vector<8x128xf32>
    %cst_56 = arith.constant 1.000000e+00 : f32
    %147 = vector.broadcast %cst_56 : f32 to vector<8x128xf32>
    %148 = arith.addf %147, %146 : vector<8x128xf32>
    %149 = arith.divf %147, %148 : vector<8x128xf32>
    %150 = vector.extract_strided_slice %149 {offsets = [0, 0], sizes = [8, 32], strides = [1, 1]} : vector<8x128xf32> to vector<8x32xf32>
    %151 = vector.extract_strided_slice %149 {offsets = [0, 32], sizes = [8, 32], strides = [1, 1]} : vector<8x128xf32> to vector<8x32xf32>
    %152 = vector.extract_strided_slice %149 {offsets = [0, 64], sizes = [8, 32], strides = [1, 1]} : vector<8x128xf32> to vector<8x32xf32>
    %cst_57 = arith.constant 2.000000e+00 : f32
    %153 = vector.broadcast %cst_57 : f32 to vector<8x32xf32>
    %154 = arith.mulf %153, %152 : vector<8x32xf32>
    %cst_58 = arith.constant 1.000000e+00 : f32
    %155 = vector.broadcast %cst_58 : f32 to vector<8x32xf32>
    %156 = arith.subf %154, %155 : vector<8x32xf32>
    %157 = vector.extract_strided_slice %149 {offsets = [0, 96], sizes = [8, 32], strides = [1, 1]} : vector<8x128xf32> to vector<8x32xf32>
    %158 = arith.mulf %151, %138 : vector<8x32xf32>
    %159 = arith.mulf %150, %156 : vector<8x32xf32>
    %160 = arith.addf %158, %159 : vector<8x32xf32>
    %161 = math.tanh %160 : vector<8x32xf32>
    %162 = arith.mulf %157, %161 : vector<8x32xf32>
    %c48_59 = arith.constant 48 : index
    %c0_60 = arith.constant 0 : index
    %163 = vector.load %arg12[%c48_59, %c0_60] : memref<64x32xf32, #tpu.memory_space<vmem>>, vector<8x32xf32>
    tpu.vector_store %arg12[%c48_59, %c0_60], %162 {strides = array<i32>} : memref<64x32xf32, #tpu.memory_space<vmem>>, vector<8x32xf32>,
    %c56 = arith.constant 56 : index
    %c0_61 = arith.constant 0 : index
    %164 = vector.load %arg11[%c56, %c0_61] : memref<64x128xf32, #tpu.memory_space<vmem>>, vector<8x128xf32>
    %cst_62 = arith.constant dense<0.000000e+00> : vector<8x128xf32>
    %165 = tpu.matmul %162, %7, %cst_62 {dimension_numbers = #tpu.dot_dimension_numbers<[1], [0], [0], [1], [0, 0, 1, 1], [], []>} : vector<8x32xf32>, vector<32x128xf32>, vector<8x128xf32> -> vector<8x128xf32>
    %166 = arith.addf %164, %165 : vector<8x128xf32>
    %167 = arith.negf %166 : vector<8x128xf32>
    %168 = math.exp %167 : vector<8x128xf32>
    %cst_63 = arith.constant 1.000000e+00 : f32
    %169 = vector.broadcast %cst_63 : f32 to vector<8x128xf32>
    %170 = arith.addf %169, %168 : vector<8x128xf32>
    %171 = arith.divf %169, %170 : vector<8x128xf32>
    %172 = vector.extract_strided_slice %171 {offsets = [0, 0], sizes = [8, 32], strides = [1, 1]} : vector<8x128xf32> to vector<8x32xf32>
    %173 = vector.extract_strided_slice %171 {offsets = [0, 32], sizes = [8, 32], strides = [1, 1]} : vector<8x128xf32> to vector<8x32xf32>
    %174 = vector.extract_strided_slice %171 {offsets = [0, 64], sizes = [8, 32], strides = [1, 1]} : vector<8x128xf32> to vector<8x32xf32>
    %cst_64 = arith.constant 2.000000e+00 : f32
    %175 = vector.broadcast %cst_64 : f32 to vector<8x32xf32>
    %176 = arith.mulf %175, %174 : vector<8x32xf32>
    %cst_65 = arith.constant 1.000000e+00 : f32
    %177 = vector.broadcast %cst_65 : f32 to vector<8x32xf32>
    %178 = arith.subf %176, %177 : vector<8x32xf32>
    %179 = vector.extract_strided_slice %171 {offsets = [0, 96], sizes = [8, 32], strides = [1, 1]} : vector<8x128xf32> to vector<8x32xf32>
    %180 = arith.mulf %173, %160 : vector<8x32xf32>
    %181 = arith.mulf %172, %178 : vector<8x32xf32>
    %182 = arith.addf %180, %181 : vector<8x32xf32>
    %183 = math.tanh %182 : vector<8x32xf32>
    %184 = arith.mulf %179, %183 : vector<8x32xf32>
    %c56_66 = arith.constant 56 : index
    %c0_67 = arith.constant 0 : index
    %185 = vector.load %arg12[%c56_66, %c0_67] : memref<64x32xf32, #tpu.memory_space<vmem>>, vector<8x32xf32>
    tpu.vector_store %arg12[%c56_66, %c0_67], %184 {strides = array<i32>} : memref<64x32xf32, #tpu.memory_space<vmem>>, vector<8x32xf32>,
    %c0_68 = arith.constant 0 : index
    %c0_69 = arith.constant 0 : index
    %186 = vector.load %arg12[%c0_68, %c0_69] : memref<64x32xf32, #tpu.memory_space<vmem>>, vector<64x32xf32>
    %c0_70 = arith.constant 0 : index
    %c0_71 = arith.constant 0 : index
    %187 = vector.load %arg5[%c0_70, %c0_71] : memref<32x128xf32, #tpu.memory_space<vmem>>, vector<32x128xf32>
    %cst_72 = arith.constant dense<0.000000e+00> : vector<64x128xf32>
    %188 = tpu.matmul %186, %187, %cst_72 {dimension_numbers = #tpu.dot_dimension_numbers<[1], [0], [0], [1], [0, 0, 1, 1], [], []>} : vector<64x32xf32>, vector<32x128xf32>, vector<64x128xf32> -> vector<64x128xf32>
    %c0_73 = arith.constant 0 : index
    %c0_74 = arith.constant 0 : index
    %189 = vector.load %arg7[%c0_73, %c0_74] : memref<1x128xf32, #tpu.memory_space<vmem>>, vector<1x128xf32>
    %190 = vector.broadcast %189 : vector<1x128xf32> to vector<64x128xf32>
    %191 = arith.addf %188, %190 : vector<64x128xf32>
    %c0_75 = arith.constant 0 : index
    %c0_76 = arith.constant 0 : index
    %192 = vector.load %arg11[%c0_75, %c0_76] : memref<64x128xf32, #tpu.memory_space<vmem>>, vector<64x128xf32>
    tpu.vector_store %arg11[%c0_75, %c0_76], %191 {strides = array<i32>} : memref<64x128xf32, #tpu.memory_space<vmem>>, vector<64x128xf32>,
    %c0_77 = arith.constant 0 : index
    %c0_78 = arith.constant 0 : index
    %193 = vector.load %arg6[%c0_77, %c0_78] : memref<32x128xf32, #tpu.memory_space<vmem>>, vector<32x128xf32>
    %cst_79 = arith.constant 0.000000e+00 : f32
    %194 = vector.broadcast %cst_79 : f32 to vector<8x32xf32>
    %cst_80 = arith.constant 0.000000e+00 : f32
    %195 = vector.broadcast %cst_80 : f32 to vector<8x32xf32>
    %c0_81 = arith.constant 0 : index
    %c0_82 = arith.constant 0 : index
    %196 = vector.load %arg11[%c0_81, %c0_82] : memref<64x128xf32, #tpu.memory_space<vmem>>, vector<8x128xf32>
    %cst_83 = arith.constant dense<0.000000e+00> : vector<8x128xf32>
    %197 = tpu.matmul %194, %193, %cst_83 {dimension_numbers = #tpu.dot_dimension_numbers<[1], [0], [0], [1], [0, 0, 1, 1], [], []>} : vector<8x32xf32>, vector<32x128xf32>, vector<8x128xf32> -> vector<8x128xf32>
    %198 = arith.addf %196, %197 : vector<8x128xf32>
    %199 = arith.negf %198 : vector<8x128xf32>
    %200 = math.exp %199 : vector<8x128xf32>
    %cst_84 = arith.constant 1.000000e+00 : f32
    %201 = vector.broadcast %cst_84 : f32 to vector<8x128xf32>
    %202 = arith.addf %201, %200 : vector<8x128xf32>
    %203 = arith.divf %201, %202 : vector<8x128xf32>
    %204 = vector.extract_strided_slice %203 {offsets = [0, 0], sizes = [8, 32], strides = [1, 1]} : vector<8x128xf32> to vector<8x32xf32>
    %205 = vector.extract_strided_slice %203 {offsets = [0, 32], sizes = [8, 32], strides = [1, 1]} : vector<8x128xf32> to vector<8x32xf32>
    %206 = vector.extract_strided_slice %203 {offsets = [0, 64], sizes = [8, 32], strides = [1, 1]} : vector<8x128xf32> to vector<8x32xf32>
    %cst_85 = arith.constant 2.000000e+00 : f32
    %207 = vector.broadcast %cst_85 : f32 to vector<8x32xf32>
    %208 = arith.mulf %207, %206 : vector<8x32xf32>
    %cst_86 = arith.constant 1.000000e+00 : f32
    %209 = vector.broadcast %cst_86 : f32 to vector<8x32xf32>
    %210 = arith.subf %208, %209 : vector<8x32xf32>
    %211 = vector.extract_strided_slice %203 {offsets = [0, 96], sizes = [8, 32], strides = [1, 1]} : vector<8x128xf32> to vector<8x32xf32>
    %212 = arith.mulf %205, %195 : vector<8x32xf32>
    %213 = arith.mulf %204, %210 : vector<8x32xf32>
    %214 = arith.addf %212, %213 : vector<8x32xf32>
    %215 = math.tanh %214 : vector<8x32xf32>
    %216 = arith.mulf %211, %215 : vector<8x32xf32>
    %c0_87 = arith.constant 0 : index
    %c0_88 = arith.constant 0 : index
    %217 = vector.load %arg12[%c0_87, %c0_88] : memref<64x32xf32, #tpu.memory_space<vmem>>, vector<8x32xf32>
    tpu.vector_store %arg12[%c0_87, %c0_88], %216 {strides = array<i32>} : memref<64x32xf32, #tpu.memory_space<vmem>>, vector<8x32xf32>,
    %c8_89 = arith.constant 8 : index
    %c0_90 = arith.constant 0 : index
    %218 = vector.load %arg11[%c8_89, %c0_90] : memref<64x128xf32, #tpu.memory_space<vmem>>, vector<8x128xf32>
    %cst_91 = arith.constant dense<0.000000e+00> : vector<8x128xf32>
    %219 = tpu.matmul %216, %193, %cst_91 {dimension_numbers = #tpu.dot_dimension_numbers<[1], [0], [0], [1], [0, 0, 1, 1], [], []>} : vector<8x32xf32>, vector<32x128xf32>, vector<8x128xf32> -> vector<8x128xf32>
    %220 = arith.addf %218, %219 : vector<8x128xf32>
    %221 = arith.negf %220 : vector<8x128xf32>
    %222 = math.exp %221 : vector<8x128xf32>
    %cst_92 = arith.constant 1.000000e+00 : f32
    %223 = vector.broadcast %cst_92 : f32 to vector<8x128xf32>
    %224 = arith.addf %223, %222 : vector<8x128xf32>
    %225 = arith.divf %223, %224 : vector<8x128xf32>
    %226 = vector.extract_strided_slice %225 {offsets = [0, 0], sizes = [8, 32], strides = [1, 1]} : vector<8x128xf32> to vector<8x32xf32>
    %227 = vector.extract_strided_slice %225 {offsets = [0, 32], sizes = [8, 32], strides = [1, 1]} : vector<8x128xf32> to vector<8x32xf32>
    %228 = vector.extract_strided_slice %225 {offsets = [0, 64], sizes = [8, 32], strides = [1, 1]} : vector<8x128xf32> to vector<8x32xf32>
    %cst_93 = arith.constant 2.000000e+00 : f32
    %229 = vector.broadcast %cst_93 : f32 to vector<8x32xf32>
    %230 = arith.mulf %229, %228 : vector<8x32xf32>
    %cst_94 = arith.constant 1.000000e+00 : f32
    %231 = vector.broadcast %cst_94 : f32 to vector<8x32xf32>
    %232 = arith.subf %230, %231 : vector<8x32xf32>
    %233 = vector.extract_strided_slice %225 {offsets = [0, 96], sizes = [8, 32], strides = [1, 1]} : vector<8x128xf32> to vector<8x32xf32>
    %234 = arith.mulf %227, %214 : vector<8x32xf32>
    %235 = arith.mulf %226, %232 : vector<8x32xf32>
    %236 = arith.addf %234, %235 : vector<8x32xf32>
    %237 = math.tanh %236 : vector<8x32xf32>
    %238 = arith.mulf %233, %237 : vector<8x32xf32>
    %c8_95 = arith.constant 8 : index
    %c0_96 = arith.constant 0 : index
    %239 = vector.load %arg12[%c8_95, %c0_96] : memref<64x32xf32, #tpu.memory_space<vmem>>, vector<8x32xf32>
    tpu.vector_store %arg12[%c8_95, %c0_96], %238 {strides = array<i32>} : memref<64x32xf32, #tpu.memory_space<vmem>>, vector<8x32xf32>,
    %c16_97 = arith.constant 16 : index
    %c0_98 = arith.constant 0 : index
    %240 = vector.load %arg11[%c16_97, %c0_98] : memref<64x128xf32, #tpu.memory_space<vmem>>, vector<8x128xf32>
    %cst_99 = arith.constant dense<0.000000e+00> : vector<8x128xf32>
    %241 = tpu.matmul %238, %193, %cst_99 {dimension_numbers = #tpu.dot_dimension_numbers<[1], [0], [0], [1], [0, 0, 1, 1], [], []>} : vector<8x32xf32>, vector<32x128xf32>, vector<8x128xf32> -> vector<8x128xf32>
    %242 = arith.addf %240, %241 : vector<8x128xf32>
    %243 = arith.negf %242 : vector<8x128xf32>
    %244 = math.exp %243 : vector<8x128xf32>
    %cst_100 = arith.constant 1.000000e+00 : f32
    %245 = vector.broadcast %cst_100 : f32 to vector<8x128xf32>
    %246 = arith.addf %245, %244 : vector<8x128xf32>
    %247 = arith.divf %245, %246 : vector<8x128xf32>
    %248 = vector.extract_strided_slice %247 {offsets = [0, 0], sizes = [8, 32], strides = [1, 1]} : vector<8x128xf32> to vector<8x32xf32>
    %249 = vector.extract_strided_slice %247 {offsets = [0, 32], sizes = [8, 32], strides = [1, 1]} : vector<8x128xf32> to vector<8x32xf32>
    %250 = vector.extract_strided_slice %247 {offsets = [0, 64], sizes = [8, 32], strides = [1, 1]} : vector<8x128xf32> to vector<8x32xf32>
    %cst_101 = arith.constant 2.000000e+00 : f32
    %251 = vector.broadcast %cst_101 : f32 to vector<8x32xf32>
    %252 = arith.mulf %251, %250 : vector<8x32xf32>
    %cst_102 = arith.constant 1.000000e+00 : f32
    %253 = vector.broadcast %cst_102 : f32 to vector<8x32xf32>
    %254 = arith.subf %252, %253 : vector<8x32xf32>
    %255 = vector.extract_strided_slice %247 {offsets = [0, 96], sizes = [8, 32], strides = [1, 1]} : vector<8x128xf32> to vector<8x32xf32>
    %256 = arith.mulf %249, %236 : vector<8x32xf32>
    %257 = arith.mulf %248, %254 : vector<8x32xf32>
    %258 = arith.addf %256, %257 : vector<8x32xf32>
    %259 = math.tanh %258 : vector<8x32xf32>
    %260 = arith.mulf %255, %259 : vector<8x32xf32>
    %c16_103 = arith.constant 16 : index
    %c0_104 = arith.constant 0 : index
    %261 = vector.load %arg12[%c16_103, %c0_104] : memref<64x32xf32, #tpu.memory_space<vmem>>, vector<8x32xf32>
    tpu.vector_store %arg12[%c16_103, %c0_104], %260 {strides = array<i32>} : memref<64x32xf32, #tpu.memory_space<vmem>>, vector<8x32xf32>,
    %c24_105 = arith.constant 24 : index
    %c0_106 = arith.constant 0 : index
    %262 = vector.load %arg11[%c24_105, %c0_106] : memref<64x128xf32, #tpu.memory_space<vmem>>, vector<8x128xf32>
    %cst_107 = arith.constant dense<0.000000e+00> : vector<8x128xf32>
    %263 = tpu.matmul %260, %193, %cst_107 {dimension_numbers = #tpu.dot_dimension_numbers<[1], [0], [0], [1], [0, 0, 1, 1], [], []>} : vector<8x32xf32>, vector<32x128xf32>, vector<8x128xf32> -> vector<8x128xf32>
    %264 = arith.addf %262, %263 : vector<8x128xf32>
    %265 = arith.negf %264 : vector<8x128xf32>
    %266 = math.exp %265 : vector<8x128xf32>
    %cst_108 = arith.constant 1.000000e+00 : f32
    %267 = vector.broadcast %cst_108 : f32 to vector<8x128xf32>
    %268 = arith.addf %267, %266 : vector<8x128xf32>
    %269 = arith.divf %267, %268 : vector<8x128xf32>
    %270 = vector.extract_strided_slice %269 {offsets = [0, 0], sizes = [8, 32], strides = [1, 1]} : vector<8x128xf32> to vector<8x32xf32>
    %271 = vector.extract_strided_slice %269 {offsets = [0, 32], sizes = [8, 32], strides = [1, 1]} : vector<8x128xf32> to vector<8x32xf32>
    %272 = vector.extract_strided_slice %269 {offsets = [0, 64], sizes = [8, 32], strides = [1, 1]} : vector<8x128xf32> to vector<8x32xf32>
    %cst_109 = arith.constant 2.000000e+00 : f32
    %273 = vector.broadcast %cst_109 : f32 to vector<8x32xf32>
    %274 = arith.mulf %273, %272 : vector<8x32xf32>
    %cst_110 = arith.constant 1.000000e+00 : f32
    %275 = vector.broadcast %cst_110 : f32 to vector<8x32xf32>
    %276 = arith.subf %274, %275 : vector<8x32xf32>
    %277 = vector.extract_strided_slice %269 {offsets = [0, 96], sizes = [8, 32], strides = [1, 1]} : vector<8x128xf32> to vector<8x32xf32>
    %278 = arith.mulf %271, %258 : vector<8x32xf32>
    %279 = arith.mulf %270, %276 : vector<8x32xf32>
    %280 = arith.addf %278, %279 : vector<8x32xf32>
    %281 = math.tanh %280 : vector<8x32xf32>
    %282 = arith.mulf %277, %281 : vector<8x32xf32>
    %c24_111 = arith.constant 24 : index
    %c0_112 = arith.constant 0 : index
    %283 = vector.load %arg12[%c24_111, %c0_112] : memref<64x32xf32, #tpu.memory_space<vmem>>, vector<8x32xf32>
    tpu.vector_store %arg12[%c24_111, %c0_112], %282 {strides = array<i32>} : memref<64x32xf32, #tpu.memory_space<vmem>>, vector<8x32xf32>,
    %c32_113 = arith.constant 32 : index
    %c0_114 = arith.constant 0 : index
    %284 = vector.load %arg11[%c32_113, %c0_114] : memref<64x128xf32, #tpu.memory_space<vmem>>, vector<8x128xf32>
    %cst_115 = arith.constant dense<0.000000e+00> : vector<8x128xf32>
    %285 = tpu.matmul %282, %193, %cst_115 {dimension_numbers = #tpu.dot_dimension_numbers<[1], [0], [0], [1], [0, 0, 1, 1], [], []>} : vector<8x32xf32>, vector<32x128xf32>, vector<8x128xf32> -> vector<8x128xf32>
    %286 = arith.addf %284, %285 : vector<8x128xf32>
    %287 = arith.negf %286 : vector<8x128xf32>
    %288 = math.exp %287 : vector<8x128xf32>
    %cst_116 = arith.constant 1.000000e+00 : f32
    %289 = vector.broadcast %cst_116 : f32 to vector<8x128xf32>
    %290 = arith.addf %289, %288 : vector<8x128xf32>
    %291 = arith.divf %289, %290 : vector<8x128xf32>
    %292 = vector.extract_strided_slice %291 {offsets = [0, 0], sizes = [8, 32], strides = [1, 1]} : vector<8x128xf32> to vector<8x32xf32>
    %293 = vector.extract_strided_slice %291 {offsets = [0, 32], sizes = [8, 32], strides = [1, 1]} : vector<8x128xf32> to vector<8x32xf32>
    %294 = vector.extract_strided_slice %291 {offsets = [0, 64], sizes = [8, 32], strides = [1, 1]} : vector<8x128xf32> to vector<8x32xf32>
    %cst_117 = arith.constant 2.000000e+00 : f32
    %295 = vector.broadcast %cst_117 : f32 to vector<8x32xf32>
    %296 = arith.mulf %295, %294 : vector<8x32xf32>
    %cst_118 = arith.constant 1.000000e+00 : f32
    %297 = vector.broadcast %cst_118 : f32 to vector<8x32xf32>
    %298 = arith.subf %296, %297 : vector<8x32xf32>
    %299 = vector.extract_strided_slice %291 {offsets = [0, 96], sizes = [8, 32], strides = [1, 1]} : vector<8x128xf32> to vector<8x32xf32>
    %300 = arith.mulf %293, %280 : vector<8x32xf32>
    %301 = arith.mulf %292, %298 : vector<8x32xf32>
    %302 = arith.addf %300, %301 : vector<8x32xf32>
    %303 = math.tanh %302 : vector<8x32xf32>
    %304 = arith.mulf %299, %303 : vector<8x32xf32>
    %c32_119 = arith.constant 32 : index
    %c0_120 = arith.constant 0 : index
    %305 = vector.load %arg12[%c32_119, %c0_120] : memref<64x32xf32, #tpu.memory_space<vmem>>, vector<8x32xf32>
    tpu.vector_store %arg12[%c32_119, %c0_120], %304 {strides = array<i32>} : memref<64x32xf32, #tpu.memory_space<vmem>>, vector<8x32xf32>,
    %c40_121 = arith.constant 40 : index
    %c0_122 = arith.constant 0 : index
    %306 = vector.load %arg11[%c40_121, %c0_122] : memref<64x128xf32, #tpu.memory_space<vmem>>, vector<8x128xf32>
    %cst_123 = arith.constant dense<0.000000e+00> : vector<8x128xf32>
    %307 = tpu.matmul %304, %193, %cst_123 {dimension_numbers = #tpu.dot_dimension_numbers<[1], [0], [0], [1], [0, 0, 1, 1], [], []>} : vector<8x32xf32>, vector<32x128xf32>, vector<8x128xf32> -> vector<8x128xf32>
    %308 = arith.addf %306, %307 : vector<8x128xf32>
    %309 = arith.negf %308 : vector<8x128xf32>
    %310 = math.exp %309 : vector<8x128xf32>
    %cst_124 = arith.constant 1.000000e+00 : f32
    %311 = vector.broadcast %cst_124 : f32 to vector<8x128xf32>
    %312 = arith.addf %311, %310 : vector<8x128xf32>
    %313 = arith.divf %311, %312 : vector<8x128xf32>
    %314 = vector.extract_strided_slice %313 {offsets = [0, 0], sizes = [8, 32], strides = [1, 1]} : vector<8x128xf32> to vector<8x32xf32>
    %315 = vector.extract_strided_slice %313 {offsets = [0, 32], sizes = [8, 32], strides = [1, 1]} : vector<8x128xf32> to vector<8x32xf32>
    %316 = vector.extract_strided_slice %313 {offsets = [0, 64], sizes = [8, 32], strides = [1, 1]} : vector<8x128xf32> to vector<8x32xf32>
    %cst_125 = arith.constant 2.000000e+00 : f32
    %317 = vector.broadcast %cst_125 : f32 to vector<8x32xf32>
    %318 = arith.mulf %317, %316 : vector<8x32xf32>
    %cst_126 = arith.constant 1.000000e+00 : f32
    %319 = vector.broadcast %cst_126 : f32 to vector<8x32xf32>
    %320 = arith.subf %318, %319 : vector<8x32xf32>
    %321 = vector.extract_strided_slice %313 {offsets = [0, 96], sizes = [8, 32], strides = [1, 1]} : vector<8x128xf32> to vector<8x32xf32>
    %322 = arith.mulf %315, %302 : vector<8x32xf32>
    %323 = arith.mulf %314, %320 : vector<8x32xf32>
    %324 = arith.addf %322, %323 : vector<8x32xf32>
    %325 = math.tanh %324 : vector<8x32xf32>
    %326 = arith.mulf %321, %325 : vector<8x32xf32>
    %c40_127 = arith.constant 40 : index
    %c0_128 = arith.constant 0 : index
    %327 = vector.load %arg12[%c40_127, %c0_128] : memref<64x32xf32, #tpu.memory_space<vmem>>, vector<8x32xf32>
    tpu.vector_store %arg12[%c40_127, %c0_128], %326 {strides = array<i32>} : memref<64x32xf32, #tpu.memory_space<vmem>>, vector<8x32xf32>,
    %c48_129 = arith.constant 48 : index
    %c0_130 = arith.constant 0 : index
    %328 = vector.load %arg11[%c48_129, %c0_130] : memref<64x128xf32, #tpu.memory_space<vmem>>, vector<8x128xf32>
    %cst_131 = arith.constant dense<0.000000e+00> : vector<8x128xf32>
    %329 = tpu.matmul %326, %193, %cst_131 {dimension_numbers = #tpu.dot_dimension_numbers<[1], [0], [0], [1], [0, 0, 1, 1], [], []>} : vector<8x32xf32>, vector<32x128xf32>, vector<8x128xf32> -> vector<8x128xf32>
    %330 = arith.addf %328, %329 : vector<8x128xf32>
    %331 = arith.negf %330 : vector<8x128xf32>
    %332 = math.exp %331 : vector<8x128xf32>
    %cst_132 = arith.constant 1.000000e+00 : f32
    %333 = vector.broadcast %cst_132 : f32 to vector<8x128xf32>
    %334 = arith.addf %333, %332 : vector<8x128xf32>
    %335 = arith.divf %333, %334 : vector<8x128xf32>
    %336 = vector.extract_strided_slice %335 {offsets = [0, 0], sizes = [8, 32], strides = [1, 1]} : vector<8x128xf32> to vector<8x32xf32>
    %337 = vector.extract_strided_slice %335 {offsets = [0, 32], sizes = [8, 32], strides = [1, 1]} : vector<8x128xf32> to vector<8x32xf32>
    %338 = vector.extract_strided_slice %335 {offsets = [0, 64], sizes = [8, 32], strides = [1, 1]} : vector<8x128xf32> to vector<8x32xf32>
    %cst_133 = arith.constant 2.000000e+00 : f32
    %339 = vector.broadcast %cst_133 : f32 to vector<8x32xf32>
    %340 = arith.mulf %339, %338 : vector<8x32xf32>
    %cst_134 = arith.constant 1.000000e+00 : f32
    %341 = vector.broadcast %cst_134 : f32 to vector<8x32xf32>
    %342 = arith.subf %340, %341 : vector<8x32xf32>
    %343 = vector.extract_strided_slice %335 {offsets = [0, 96], sizes = [8, 32], strides = [1, 1]} : vector<8x128xf32> to vector<8x32xf32>
    %344 = arith.mulf %337, %324 : vector<8x32xf32>
    %345 = arith.mulf %336, %342 : vector<8x32xf32>
    %346 = arith.addf %344, %345 : vector<8x32xf32>
    %347 = math.tanh %346 : vector<8x32xf32>
    %348 = arith.mulf %343, %347 : vector<8x32xf32>
    %c48_135 = arith.constant 48 : index
    %c0_136 = arith.constant 0 : index
    %349 = vector.load %arg12[%c48_135, %c0_136] : memref<64x32xf32, #tpu.memory_space<vmem>>, vector<8x32xf32>
    tpu.vector_store %arg12[%c48_135, %c0_136], %348 {strides = array<i32>} : memref<64x32xf32, #tpu.memory_space<vmem>>, vector<8x32xf32>,
    %c56_137 = arith.constant 56 : index
    %c0_138 = arith.constant 0 : index
    %350 = vector.load %arg11[%c56_137, %c0_138] : memref<64x128xf32, #tpu.memory_space<vmem>>, vector<8x128xf32>
    %cst_139 = arith.constant dense<0.000000e+00> : vector<8x128xf32>
    %351 = tpu.matmul %348, %193, %cst_139 {dimension_numbers = #tpu.dot_dimension_numbers<[1], [0], [0], [1], [0, 0, 1, 1], [], []>} : vector<8x32xf32>, vector<32x128xf32>, vector<8x128xf32> -> vector<8x128xf32>
    %352 = arith.addf %350, %351 : vector<8x128xf32>
    %353 = arith.negf %352 : vector<8x128xf32>
    %354 = math.exp %353 : vector<8x128xf32>
    %cst_140 = arith.constant 1.000000e+00 : f32
    %355 = vector.broadcast %cst_140 : f32 to vector<8x128xf32>
    %356 = arith.addf %355, %354 : vector<8x128xf32>
    %357 = arith.divf %355, %356 : vector<8x128xf32>
    %358 = vector.extract_strided_slice %357 {offsets = [0, 0], sizes = [8, 32], strides = [1, 1]} : vector<8x128xf32> to vector<8x32xf32>
    %359 = vector.extract_strided_slice %357 {offsets = [0, 32], sizes = [8, 32], strides = [1, 1]} : vector<8x128xf32> to vector<8x32xf32>
    %360 = vector.extract_strided_slice %357 {offsets = [0, 64], sizes = [8, 32], strides = [1, 1]} : vector<8x128xf32> to vector<8x32xf32>
    %cst_141 = arith.constant 2.000000e+00 : f32
    %361 = vector.broadcast %cst_141 : f32 to vector<8x32xf32>
    %362 = arith.mulf %361, %360 : vector<8x32xf32>
    %cst_142 = arith.constant 1.000000e+00 : f32
    %363 = vector.broadcast %cst_142 : f32 to vector<8x32xf32>
    %364 = arith.subf %362, %363 : vector<8x32xf32>
    %365 = vector.extract_strided_slice %357 {offsets = [0, 96], sizes = [8, 32], strides = [1, 1]} : vector<8x128xf32> to vector<8x32xf32>
    %366 = arith.mulf %359, %346 : vector<8x32xf32>
    %367 = arith.mulf %358, %364 : vector<8x32xf32>
    %368 = arith.addf %366, %367 : vector<8x32xf32>
    %369 = math.tanh %368 : vector<8x32xf32>
    %370 = arith.mulf %365, %369 : vector<8x32xf32>
    %c56_143 = arith.constant 56 : index
    %c0_144 = arith.constant 0 : index
    %371 = vector.load %arg12[%c56_143, %c0_144] : memref<64x32xf32, #tpu.memory_space<vmem>>, vector<8x32xf32>
    tpu.vector_store %arg12[%c56_143, %c0_144], %370 {strides = array<i32>} : memref<64x32xf32, #tpu.memory_space<vmem>>, vector<8x32xf32>,
    %c0_145 = arith.constant 0 : index
    %c0_146 = arith.constant 0 : index
    %372 = vector.load %arg12[%c0_145, %c0_146] : memref<64x32xf32, #tpu.memory_space<vmem>>, vector<64x32xf32>
    %cst_147 = arith.constant 0.000000e+00 : f32
    %373 = vector.broadcast %cst_147 : f32 to vector<64x32xf32>
    %374 = arith.maximumf %372, %373 : vector<64x32xf32>
    %c0_148 = arith.constant 0 : index
    %c0_149 = arith.constant 0 : index
    %375 = vector.load %arg8[%c0_148, %c0_149] : memref<32x128xf32, #tpu.memory_space<vmem>>, vector<32x128xf32>
    %cst_150 = arith.constant dense<0.000000e+00> : vector<64x128xf32>
    %376 = tpu.matmul %374, %375, %cst_150 {dimension_numbers = #tpu.dot_dimension_numbers<[1], [0], [0], [1], [0, 0, 1, 1], [], []>} : vector<64x32xf32>, vector<32x128xf32>, vector<64x128xf32> -> vector<64x128xf32>
    %c0_151 = arith.constant 0 : index
    %c0_152 = arith.constant 0 : index
    %377 = vector.load %arg9[%c0_151, %c0_152] : memref<1x128xf32, #tpu.memory_space<vmem>>, vector<1x128xf32>
    %378 = vector.broadcast %377 : vector<1x128xf32> to vector<64x128xf32>
    %379 = arith.addf %376, %378 : vector<64x128xf32>
    %c0_153 = arith.constant 0 : index
    %c0_154 = arith.constant 0 : index
    %380 = vector.load %arg10[%c0_153, %c0_154] : memref<64x128xf32, #tpu.memory_space<vmem>>, vector<64x128xf32>
    tpu.vector_store %arg10[%c0_153, %c0_154], %379 {strides = array<i32>} : memref<64x128xf32, #tpu.memory_space<vmem>>, vector<64x128xf32>,
    return
  }
  func.func @transform_0(%arg0: i32) -> (i32, i32) {
    %c0_i32 = arith.constant 0 : i32
    %c0_i32_0 = arith.constant 0 : i32
    %c0_i32_1 = arith.constant 0 : i32
    return %c0_i32, %c0_i32_0 : i32, i32
  }
  func.func @transform_1(%arg0: i32) -> (i32, i32) {
    %c0_i32 = arith.constant 0 : i32
    %c0_i32_0 = arith.constant 0 : i32
    %c0_i32_1 = arith.constant 0 : i32
    return %c0_i32, %c0_i32_0 : i32, i32
  }
  func.func @transform_2(%arg0: i32) -> (i32, i32) {
    %c0_i32 = arith.constant 0 : i32
    %c0_i32_0 = arith.constant 0 : i32
    %c0_i32_1 = arith.constant 0 : i32
    return %c0_i32, %c0_i32_0 : i32, i32
  }
  func.func @transform_3(%arg0: i32) -> (i32, i32) {
    %c0_i32 = arith.constant 0 : i32
    %c0_i32_0 = arith.constant 0 : i32
    %c0_i32_1 = arith.constant 0 : i32
    return %c0_i32, %c0_i32_0 : i32, i32
  }
  func.func @transform_4(%arg0: i32) -> (i32, i32) {
    %c0_i32 = arith.constant 0 : i32
    %c0_i32_0 = arith.constant 0 : i32
    %c0_i32_1 = arith.constant 0 : i32
    return %c0_i32, %c0_i32_0 : i32, i32
  }
  func.func @transform_5(%arg0: i32) -> (i32, i32) {
    %c0_i32 = arith.constant 0 : i32
    %c0_i32_0 = arith.constant 0 : i32
    %c0_i32_1 = arith.constant 0 : i32
    return %c0_i32, %c0_i32_0 : i32, i32
  }
  func.func @transform_6(%arg0: i32) -> (i32, i32) {
    %c0_i32 = arith.constant 0 : i32
    %c0_i32_0 = arith.constant 0 : i32
    %c0_i32_1 = arith.constant 0 : i32
    return %c0_i32, %c0_i32_0 : i32, i32
  }
  func.func @transform_7(%arg0: i32) -> (i32, i32) {
    %c0_i32 = arith.constant 0 : i32
    %c0_i32_0 = arith.constant 0 : i32
    %c0_i32_1 = arith.constant 0 : i32
    return %c0_i32, %c0_i32_0 : i32, i32
  }
  func.func @transform_8(%arg0: i32) -> (i32, i32) {
    %c0_i32 = arith.constant 0 : i32
    %c0_i32_0 = arith.constant 0 : i32
    %c0_i32_1 = arith.constant 0 : i32
    return %c0_i32, %c0_i32_0 : i32, i32
  }
  func.func @transform_9(%arg0: i32) -> (i32, i32) {
    %c0_i32 = arith.constant 0 : i32
    %c0_i32_0 = arith.constant 0 : i32
    %c0_i32_1 = arith.constant 0 : i32
    return %c0_i32, %c0_i32_0 : i32, i32
  }
}

</mosaic_0001>

<llo_original>
// kernel: lstm_model.1
$region0: #{lstm_model.1}
  #allocation0 [shape = 'u32[]', space=smem, size = 0x4, offset = 0x4, fixed_abs, tag = 'smem constant byte address 0x4 - core index']
  #allocation1 [shape = 'u32[144,128]{1,0:T(1,128)}', space=vmem, size = 0x12000, scoped, tag = 'internal scratch']
  #allocation2 [shape = 'f32[64,128]{1,0:T(8,128)}', space=vmem, size = 0x8000, scoped, tag = 'scratch operand']
  #allocation3 [shape = 'f32[64,32]{1,0:T(8,128)}', space=vmem, size = 0x8000, scoped, tag = 'scratch operand']
  %s0 = inlined_call_operand.vmem [shape: f32[64,16], index: 0, kind: input, shape index: {}]
  %s1 = inlined_call_operand.hbm [shape: f32[16,128], index: 1, kind: input, shape index: {}]
  %s2 = inlined_call_operand.vmem [shape: f32[32,128], index: 2, kind: input, shape index: {}]
  %s3 = inlined_call_operand.vmem [shape: f32[1,128], index: 3, kind: input, shape index: {}]
  %s4 = inlined_call_operand.vmem [shape: f32[32,128], index: 4, kind: input, shape index: {}]
  %s5 = inlined_call_operand.vmem [shape: f32[32,128], index: 5, kind: input, shape index: {}]
  %s6 = inlined_call_operand.vmem [shape: f32[1,128], index: 6, kind: input, shape index: {}]
  %s7 = inlined_call_operand.hbm [shape: f32[32,128], index: 7, kind: input, shape index: {}]
  %s8 = inlined_call_operand.hbm [shape: f32[1,128], index: 8, kind: input, shape index: {}]
  %s9 = inlined_call_operand.vmem [shape: f32[64,128], index: 9, kind: output, shape index: {}]
  %s10 = sld [smem:[#allocation0]]
  $region58: #{lstm_model.1} parent=0
    _
  %s12 = ssub.s32 1, %s10
  %s13 = scalar_select 0, %s12, %s10
  $region1: #{lstm_model.1} parent=0
    #allocation4 [shape = 'u8[8192]{0}', space=vmem, size = 0x2000, scoped, tag = 'input window, operand 1, single buffered']
    #allocation5 [shape = 's32[1]{0}', space=sflag, size = 0x4, scoped, tag = 'scoped memory for lstm_model.1']
    #allocation6 [shape = 'u8[16384]{0}', space=vmem, size = 0x4000, scoped, tag = 'input window, operand 7, single buffered']
    #allocation7 [shape = 's32[1]{0}', space=sflag, size = 0x4, scoped, tag = 'scoped memory for lstm_model.1']
    #allocation8 [shape = 'u8[512]{0}', space=vmem, size = 0x400, scoped, tag = 'input window, operand 8, single buffered']
    %14 = vsyncpa [#allocation5], 0
    %15 = vsyncpa [#allocation7], 0
    // Predicated region
    $region2: #{lstm_model.1} parent=1 // pred_check
      _
    $region3: #{lstm_model.1} parent=1 // pred_check_branch
      %17 = sbr.rel (0) target = $region5
    $region4: #{lstm_model.1} parent=1 // pred_region
      _
    $region5: #{lstm_model.1} parent=1 // pred_fallthru
      _
    // Predicated region
    $region6: #{lstm_model.1} parent=1 // pred_check
      _
    $region7: #{lstm_model.1} parent=1 // pred_check_branch
      %19 = sbr.rel (0) target = $region9
    $region8: #{lstm_model.1} parent=1 // pred_region
      %s21 = ssub.s32 256, 256
      %22 = vsyncadd [#allocation5], %s21
      %s23 = sshll.u32 [#allocation4], 4
      %s24 = int_to_ptr.vmem [resolvable:$true] %s23
      %29 = dma.hbm_to_vmem [thread:$0]  %s1, 256, %s24, [#allocation5], 128, 128, 8
    $region9: #{lstm_model.1} parent=1 // pred_fallthru
      _
    // Predicated region
    $region10: #{lstm_model.1} parent=1 // pred_check
      _
    $region11: #{lstm_model.1} parent=1 // pred_check_branch
      %31 = sbr.rel (0) target = $region13
    $region12: #{lstm_model.1} parent=1 // pred_region
      _
    $region13: #{lstm_model.1} parent=1 // pred_fallthru
      _
    // Predicated region
    $region14: #{lstm_model.1} parent=1 // pred_check
      _
    $region15: #{lstm_model.1} parent=1 // pred_check_branch
      %33 = sbr.rel (0) target = $region17
    $region16: #{lstm_model.1} parent=1 // pred_region
      _
    $region17: #{lstm_model.1} parent=1 // pred_fallthru
      _
    // Predicated region
    $region18: #{lstm_model.1} parent=1 // pred_check
      _
    $region19: #{lstm_model.1} parent=1 // pred_check_branch
      %35 = sbr.rel (0) target = $region21
    $region20: #{lstm_model.1} parent=1 // pred_region
      _
    $region21: #{lstm_model.1} parent=1 // pred_fallthru
      _
    // Predicated region
    $region22: #{lstm_model.1} parent=1 // pred_check
      _
    $region23: #{lstm_model.1} parent=1 // pred_check_branch
      %37 = sbr.rel (0) target = $region25
    $region24: #{lstm_model.1} parent=1 // pred_region
      _
    $region25: #{lstm_model.1} parent=1 // pred_fallthru
      _
    // Predicated region
    $region26: #{lstm_model.1} parent=1 // pred_check
      _
    $region27: #{lstm_model.1} parent=1 // pred_check_branch
      %39 = sbr.rel (0) target = $region29
    $region28: #{lstm_model.1} parent=1 // pred_region
      _
    $region29: #{lstm_model.1} parent=1 // pred_fallthru
      _
    // Predicated region
    $region30: #{lstm_model.1} parent=1 // pred_check
      _
    $region31: #{lstm_model.1} parent=1 // pred_check_branch
      %41 = sbr.rel (0) target = $region33
    $region32: #{lstm_model.1} parent=1 // pred_region
      %s43 = ssub.s32 512, 512
      %44 = vsyncadd [#allocation7], %s43
      %s45 = sshll.u32 [#allocation6], 4
      %s46 = int_to_ptr.vmem [resolvable:$true] %s45
      %51 = dma.hbm_to_vmem [thread:$0]  %s7, 512, %s46, [#allocation7], 128, 128, 8
    $region33: #{lstm_model.1} parent=1 // pred_fallthru
      _
    // Predicated region
    $region34: #{lstm_model.1} parent=1 // pred_check
      _
    $region35: #{lstm_model.1} parent=1 // pred_check_branch
      %53 = sbr.rel (0) target = $region37
    $region36: #{lstm_model.1} parent=1 // pred_region
      %s55 = ssub.s32 16, 16
      %56 = vsyncadd [#allocation7], %s55
      %s58 = sshll.u32 [#allocation8], 4
      %s59 = int_to_ptr.vmem [resolvable:$true] %s58
      %61 = dma.hbm_to_vmem [thread:$0]  %s8, 16, %s59, [#allocation7]
    $region37: #{lstm_model.1} parent=1 // pred_fallthru
      _
    // Predicated region
    $region38: #{lstm_model.1} parent=1 // pred_check
      _
    $region39: #{lstm_model.1} parent=1 // pred_check_branch
      %63 = sbr.rel (0) target = $region41
    $region40: #{lstm_model.1} parent=1 // pred_region
      %64 = dma.done [#allocation5], 256
    $region41: #{lstm_model.1} parent=1 // pred_fallthru
      _
    // Predicated region
    $region42: #{lstm_model.1} parent=1 // pred_check
      _
    $region43: #{lstm_model.1} parent=1 // pred_check_branch
      %66 = sbr.rel (0) target = $region45
    $region44: #{lstm_model.1} parent=1 // pred_region
      %67 = dma.done [#allocation7], 512
    $region45: #{lstm_model.1} parent=1 // pred_fallthru
      _
    // Predicated region
    $region46: #{lstm_model.1} parent=1 // pred_check
      _
    $region47: #{lstm_model.1} parent=1 // pred_check_branch
      %69 = sbr.rel (0) target = $region49
    $region48: #{lstm_model.1} parent=1 // pred_region
      %70 = dma.done [#allocation7], 16
    $region49: #{lstm_model.1} parent=1 // pred_fallthru
      _
    %v71 = vld [vmem:[%s0] sm:$0xff]
    %v72 = vld [vmem:[%s0 + $0x8] sm:$0xff]
    %v73 = vld [vmem:[%s0 + $0x10] sm:$0xff]
    %v74 = vld [vmem:[%s0 + $0x18] sm:$0xff]
    %v75 = vld [vmem:[%s0 + $0x20] sm:$0xff]
    %v76 = vld [vmem:[%s0 + $0x28] sm:$0xff]
    %v77 = vld [vmem:[%s0 + $0x30] sm:$0xff]
    %v78 = vld [vmem:[%s0 + $0x38] sm:$0xff]
    %v79 = vld [vmem:[#allocation4] sm:$0xff]
    %v80 = vld [vmem:[#allocation4 + $0x8] sm:$0xff]
    %v81 = vld [vmem:[%s3] sm:$0x1]
    %v83 = vlaneseq
    %v84 = vshrl.u32 %v83, 7
    %v85 = vsub.s32 0, %v84
    %v86 = vrot.slane %v81, %v85
    %vm88 = vcmask 130048
    %v90 = vsel %vm88, %v71, 0
    %v93 = vsel %vm88, %v72, 0
    %v96 = vsel %vm88, %v73, 0
    %v99 = vsel %vm88, %v74, 0
    %v102 = vsel %vm88, %v75, 0
    %v105 = vsel %vm88, %v76, 0
    %v108 = vsel %vm88, %v77, 0
    %v111 = vsel %vm88, %v78, 0
    %113 = vmatprep.subr.mxu0 0.0
    %114 = vmatpush1.msra.mxu0 %v79
    %115 = vmatprep.subr.mxu0 0.0
    %116 = vmatpush1.msra.mxu0 %v80
    %117 = vmatprep.subr.mxu0 0.0
    %118 = vmatpush1.msra.mxu0 0.0
    %119 = vmatprep.subr.mxu0 0.0
    %120 = vmatpush1.msra.mxu0 0.0
    %121 = vmatprep.subr.mxu0 0.0
    %122 = vmatpush1.msra.mxu0 0.0
    %123 = vmatprep.subr.mxu0 0.0
    %124 = vmatpush1.msra.mxu0 0.0
    %125 = vmatprep.subr.mxu0 0.0
    %126 = vmatpush1.msra.mxu0 0.0
    %127 = vmatprep.subr.mxu0 0.0
    %128 = vmatpush1.msra.mxu0 0.0
    %129 = vmatprep.subr.mxu0 0.0
    %130 = vmatpush1.msra.mxu0 0.0
    %131 = vmatprep.subr.mxu0 0.0
    %132 = vmatpush1.msra.mxu0 0.0
    %133 = vmatprep.subr.mxu0 0.0
    %134 = vmatpush1.msra.mxu0 0.0
    %135 = vmatprep.subr.mxu0 0.0
    %136 = vmatpush1.msra.mxu0 0.0
    %137 = vmatprep.subr.mxu0 0.0
    %138 = vmatpush1.msra.mxu0 0.0
    %139 = vmatprep.subr.mxu0 0.0
    %140 = vmatpush1.msra.mxu0 0.0
    %141 = vmatprep.subr.mxu0 0.0
    %142 = vmatpush1.msra.mxu0 0.0
    %143 = vmatprep.subr.mxu0 0.0
    %144 = vmatpush1.msra.mxu0 0.0
    %145 = vmatprep.subr.mxu0 0.0
    %146 = vmatpush1.msra.mxu0 0.0
    %147 = vmatprep.subr.mxu0 0.0
    %148 = vmatpush1.msra.mxu0 0.0
    %149 = vmatprep.subr.mxu0 0.0
    %150 = vmatpush1.msra.mxu0 0.0
    %151 = vmatprep.subr.mxu0 0.0
    %152 = vmatpush1.msra.mxu0 0.0
    %153 = vmatprep.subr.mxu0 0.0
    %154 = vmatpush1.msra.mxu0 0.0
    %155 = vmatprep.subr.mxu0 0.0
    %156 = vmatpush1.msra.mxu0 0.0
    %157 = vmatprep.subr.mxu0 0.0
    %158 = vmatpush1.msra.mxu0 0.0
    %159 = vmatprep.subr.mxu0 0.0
    %160 = vmatpush1.msra.mxu0 0.0
    %161 = vmatprep.subr.mxu0 0.0
    %162 = vmatpush1.msra.mxu0 0.0
    %163 = vmatprep.subr.mxu0 0.0
    %164 = vmatpush1.msra.mxu0 0.0
    %165 = vmatprep.subr.mxu0 0.0
    %166 = vmatpush1.msra.mxu0 0.0
    %167 = vmatprep.subr.mxu0 0.0
    %168 = vmatpush1.msra.mxu0 0.0
    %169 = vmatprep.subr.mxu0 0.0
    %170 = vmatpush1.msra.mxu0 0.0
    %171 = vmatprep.subr.mxu0 0.0
    %172 = vmatpush1.msra.mxu0 0.0
    %173 = vmatprep.subr.mxu0 0.0
    %174 = vmatpush1.msra.mxu0 0.0
    %175 = vmatprep.subr.mxu0 0.0
    %176 = vmatpush1.msra.mxu0 0.0
    %177 = vmatprep.mubr.f32.mxu0 0.0
    %178 = vmatmul.mubr.f32.gmra.mrb[0].mxu0 %v90
    %v179 = vpop.f32.mrb[0].mxu0
    %v180 = vadd.f32 %v86, %v179
    %v181 = vpop.f32.mrb[0].mxu0
    %182 = vmatprep.mubr.f32.mxu0 0.0
    %183 = vmatmul.mubr.f32.gmra.mrb[0].mxu0 %v93
    %v184 = vpop.f32.mrb[0].mxu0
    %v185 = vadd.f32 %v86, %v184
    %v186 = vpop.f32.mrb[0].mxu0
    %187 = vmatprep.mubr.f32.mxu0 0.0
    %188 = vmatmul.mubr.f32.gmra.mrb[0].mxu0 %v96
    %v189 = vpop.f32.mrb[0].mxu0
    %v190 = vadd.f32 %v86, %v189
    %v191 = vpop.f32.mrb[0].mxu0
    %192 = vmatprep.mubr.f32.mxu0 0.0
    %193 = vmatmul.mubr.f32.gmra.mrb[0].mxu0 %v99
    %v194 = vpop.f32.mrb[0].mxu0
    %v195 = vadd.f32 %v86, %v194
    %v196 = vpop.f32.mrb[0].mxu0
    %197 = vmatprep.mubr.f32.mxu0 0.0
    %198 = vmatmul.mubr.f32.gmra.mrb[0].mxu0 %v102
    %v199 = vpop.f32.mrb[0].mxu0
    %v200 = vadd.f32 %v86, %v199
    %v201 = vpop.f32.mrb[0].mxu0
    %202 = vmatprep.mubr.f32.mxu0 0.0
    %203 = vmatmul.mubr.f32.gmra.mrb[0].mxu0 %v105
    %v204 = vpop.f32.mrb[0].mxu0
    %v205 = vadd.f32 %v86, %v204
    %v206 = vpop.f32.mrb[0].mxu0
    %207 = vmatprep.mubr.f32.mxu0 0.0
    %208 = vmatmul.mubr.f32.gmra.mrb[0].mxu0 %v108
    %v209 = vpop.f32.mrb[0].mxu0
    %v210 = vadd.f32 %v86, %v209
    %v211 = vpop.f32.mrb[0].mxu0
    %212 = vmatprep.mubr.f32.mxu0 0.0
    %213 = vmatmul.mubr.f32.gmra.mrb[0].mxu0 %v111
    %v214 = vpop.f32.mrb[0].mxu0
    %v215 = vadd.f32 %v86, %v214
    %v216 = vpop.f32.mrb[0].mxu0
    %217 = vdwg.mxu0
    %218 = vst [vmem:[#allocation2] sm:$0xff] %v180
    %219 = vst [vmem:[#allocation2 + $0x8] sm:$0xff] %v185
    %220 = vst [vmem:[#allocation2 + $0x10] sm:$0xff] %v190
    %221 = vst [vmem:[#allocation2 + $0x18] sm:$0xff] %v195
    %222 = vst [vmem:[#allocation2 + $0x20] sm:$0xff] %v200
    %223 = vst [vmem:[#allocation2 + $0x28] sm:$0xff] %v205
    %224 = vst [vmem:[#allocation2 + $0x30] sm:$0xff] %v210
    %225 = vst [vmem:[#allocation2 + $0x38] sm:$0xff] %v215
    %v226 = vld [vmem:[%s2] sm:$0xff]
    %v227 = vld [vmem:[%s2 + $0x8] sm:$0xff]
    %v228 = vld [vmem:[%s2 + $0x10] sm:$0xff]
    %v229 = vld [vmem:[%s2 + $0x18] sm:$0xff]
    %v230 = vld [vmem:[#allocation2] sm:$0xff]
    %vm231 = vcmask 261120
    %v233 = vsel %vm231, 0.0, 0
    %235 = vmatprep.subr.mxu0 0.0
    %236 = vmatpush1.msra.mxu0 %v226
    %237 = vmatprep.subr.mxu0 0.0
    %238 = vmatpush1.msra.mxu0 %v227
    %239 = vmatprep.subr.mxu0 0.0
    %240 = vmatpush1.msra.mxu0 %v228
    %241 = vmatprep.subr.mxu0 0.0
    %242 = vmatpush1.msra.mxu0 %v229
    %243 = vmatprep.subr.mxu0 0.0
    %244 = vmatpush1.msra.mxu0 0.0
    %245 = vmatprep.subr.mxu0 0.0
    %246 = vmatpush1.msra.mxu0 0.0
    %247 = vmatprep.subr.mxu0 0.0
    %248 = vmatpush1.msra.mxu0 0.0
    %249 = vmatprep.subr.mxu0 0.0
    %250 = vmatpush1.msra.mxu0 0.0
    %251 = vmatprep.subr.mxu0 0.0
    %252 = vmatpush1.msra.mxu0 0.0
    %253 = vmatprep.subr.mxu0 0.0
    %254 = vmatpush1.msra.mxu0 0.0
    %255 = vmatprep.subr.mxu0 0.0
    %256 = vmatpush1.msra.mxu0 0.0
    %257 = vmatprep.subr.mxu0 0.0
    %258 = vmatpush1.msra.mxu0 0.0
    %259 = vmatprep.subr.mxu0 0.0
    %260 = vmatpush1.msra.mxu0 0.0
    %261 = vmatprep.subr.mxu0 0.0
    %262 = vmatpush1.msra.mxu0 0.0
    %263 = vmatprep.subr.mxu0 0.0
    %264 = vmatpush1.msra.mxu0 0.0
    %265 = vmatprep.subr.mxu0 0.0
    %266 = vmatpush1.msra.mxu0 0.0
    %267 = vmatprep.subr.mxu0 0.0
    %268 = vmatpush1.msra.mxu0 0.0
    %269 = vmatprep.subr.mxu0 0.0
    %270 = vmatpush1.msra.mxu0 0.0
    %271 = vmatprep.subr.mxu0 0.0
    %272 = vmatpush1.msra.mxu0 0.0
    %273 = vmatprep.subr.mxu0 0.0
    %274 = vmatpush1.msra.mxu0 0.0
    %275 = vmatprep.subr.mxu0 0.0
    %276 = vmatpush1.msra.mxu0 0.0
    %277 = vmatprep.subr.mxu0 0.0
    %278 = vmatpush1.msra.mxu0 0.0
    %279 = vmatprep.subr.mxu0 0.0
    %280 = vmatpush1.msra.mxu0 0.0
    %281 = vmatprep.subr.mxu0 0.0
    %282 = vmatpush1.msra.mxu0 0.0
    %283 = vmatprep.subr.mxu0 0.0
    %284 = vmatpush1.msra.mxu0 0.0
    %285 = vmatprep.subr.mxu0 0.0
    %286 = vmatpush1.msra.mxu0 0.0
    %287 = vmatprep.subr.mxu0 0.0
    %288 = vmatpush1.msra.mxu0 0.0
    %289 = vmatprep.subr.mxu0 0.0
    %290 = vmatpush1.msra.mxu0 0.0
    %291 = vmatprep.subr.mxu0 0.0
    %292 = vmatpush1.msra.mxu0 0.0
    %293 = vmatprep.subr.mxu0 0.0
    %294 = vmatpush1.msra.mxu0 0.0
    %295 = vmatprep.subr.mxu0 0.0
    %296 = vmatpush1.msra.mxu0 0.0
    %297 = vmatprep.subr.mxu0 0.0
    %298 = vmatpush1.msra.mxu0 0.0
    %299 = vmatprep.mubr.f32.mxu0 0.0
    %300 = vmatmul.mubr.f32.gmra.mrb[0].mxu0 %v233
    %v301 = vpop.f32.mrb[0].mxu0
    %v302 = vadd.f32 0.0, %v301
    %v303 = vpop.f32.mrb[0].mxu0
    %304 = vdwg.mxu0
    %v305 = vadd.f32 %v230, %v302
    %v306 = vxor.u32 %v305, 2147483648
    %v307 = vmul.f32 %v306, 1.442695
    %v308 = vpow.pop %v307
    %v309 = vadd.f32 %v308, 1.0
    %v310 = vrcp.pop %v309
    %v311 = vmul.f32 1.0, %v310
    %v312 = vmul.f32 %v311, 2.0
    %v313 = vsub.f32 %v312, 1.0
    %v314 = vmul.f32 %v311, 0.0
    %316 = vrot.lane.b32.xlu0 %v313, 64
    %v317 = vpop.permute.xlu0 %316
    %v319 = vmul.f32 %v311, %v317
    %321 = vrot.lane.b32.xlu0 %v319, 32
    %v322 = vpop.permute.xlu0 %321
    %v324 = vadd.f32 %v314, %v322
    %v325 = vtanh.pop %v324
    %327 = vrot.lane.b32.xlu0 %v325, 64
    %v328 = vpop.permute.xlu0 %327
    %v330 = vmul.f32 %v311, %v328
    %332 = vrot.lane.b32.xlu0 %v330, 32
    %v333 = vpop.permute.xlu0 %332
    %335 = vst.msk [vmem:[#allocation3] sm:$0xff] %vm231, %v333
    %v336 = vld [vmem:[#allocation2 + $0x8] sm:$0xff]
    %v337 = vsel %vm231, %v333, 0
    %339 = vmatprep.subr.mxu0 0.0
    %340 = vmatpush1.msra.mxu0 %v226
    %341 = vmatprep.subr.mxu0 0.0
    %342 = vmatpush1.msra.mxu0 %v227
    %343 = vmatprep.subr.mxu0 0.0
    %344 = vmatpush1.msra.mxu0 %v228
    %345 = vmatprep.subr.mxu0 0.0
    %346 = vmatpush1.msra.mxu0 %v229
    %347 = vmatprep.subr.mxu0 0.0
    %348 = vmatpush1.msra.mxu0 0.0
    %349 = vmatprep.subr.mxu0 0.0
    %350 = vmatpush1.msra.mxu0 0.0
    %351 = vmatprep.subr.mxu0 0.0
    %352 = vmatpush1.msra.mxu0 0.0
    %353 = vmatprep.subr.mxu0 0.0
    %354 = vmatpush1.msra.mxu0 0.0
    %355 = vmatprep.subr.mxu0 0.0
    %356 = vmatpush1.msra.mxu0 0.0
    %357 = vmatprep.subr.mxu0 0.0
    %358 = vmatpush1.msra.mxu0 0.0
    %359 = vmatprep.subr.mxu0 0.0
    %360 = vmatpush1.msra.mxu0 0.0
    %361 = vmatprep.subr.mxu0 0.0
    %362 = vmatpush1.msra.mxu0 0.0
    %363 = vmatprep.subr.mxu0 0.0
    %364 = vmatpush1.msra.mxu0 0.0
    %365 = vmatprep.subr.mxu0 0.0
    %366 = vmatpush1.msra.mxu0 0.0
    %367 = vmatprep.subr.mxu0 0.0
    %368 = vmatpush1.msra.mxu0 0.0
    %369 = vmatprep.subr.mxu0 0.0
    %370 = vmatpush1.msra.mxu0 0.0
    %371 = vmatprep.subr.mxu0 0.0
    %372 = vmatpush1.msra.mxu0 0.0
    %373 = vmatprep.subr.mxu0 0.0
    %374 = vmatpush1.msra.mxu0 0.0
    %375 = vmatprep.subr.mxu0 0.0
    %376 = vmatpush1.msra.mxu0 0.0
    %377 = vmatprep.subr.mxu0 0.0
    %378 = vmatpush1.msra.mxu0 0.0
    %379 = vmatprep.subr.mxu0 0.0
    %380 = vmatpush1.msra.mxu0 0.0
    %381 = vmatprep.subr.mxu0 0.0
    %382 = vmatpush1.msra.mxu0 0.0
    %383 = vmatprep.subr.mxu0 0.0
    %384 = vmatpush1.msra.mxu0 0.0
    %385 = vmatprep.subr.mxu0 0.0
    %386 = vmatpush1.msra.mxu0 0.0
    %387 = vmatprep.subr.mxu0 0.0
    %388 = vmatpush1.msra.mxu0 0.0
    %389 = vmatprep.subr.mxu0 0.0
    %390 = vmatpush1.msra.mxu0 0.0
    %391 = vmatprep.subr.mxu0 0.0
    %392 = vmatpush1.msra.mxu0 0.0
    %393 = vmatprep.subr.mxu0 0.0
    %394 = vmatpush1.msra.mxu0 0.0
    %395 = vmatprep.subr.mxu0 0.0
    %396 = vmatpush1.msra.mxu0 0.0
    %397 = vmatprep.subr.mxu0 0.0
    %398 = vmatpush1.msra.mxu0 0.0
    %399 = vmatprep.subr.mxu0 0.0
    %400 = vmatpush1.msra.mxu0 0.0
    %401 = vmatprep.subr.mxu0 0.0
    %402 = vmatpush1.msra.mxu0 0.0
    %403 = vmatprep.mubr.f32.mxu0 0.0
    %404 = vmatmul.mubr.f32.gmra.mrb[0].mxu0 %v337
    %v405 = vpop.f32.mrb[0].mxu0
    %v406 = vadd.f32 0.0, %v405
    %v407 = vpop.f32.mrb[0].mxu0
    %408 = vdwg.mxu0
    %v409 = vadd.f32 %v336, %v406
    %v410 = vxor.u32 %v409, 2147483648
    %v411 = vmul.f32 %v410, 1.442695
    %v412 = vpow.pop %v411
    %v413 = vadd.f32 %v412, 1.0
    %v414 = vrcp.pop %v413
    %v415 = vmul.f32 1.0, %v414
    %v416 = vmul.f32 %v415, 2.0
    %v417 = vsub.f32 %v416, 1.0
    %v418 = vmul.f32 %v415, %v324
    %420 = vrot.lane.b32.xlu0 %v417, 64
    %v421 = vpop.permute.xlu0 %420
    %v423 = vmul.f32 %v415, %v421
    %425 = vrot.lane.b32.xlu0 %v423, 32
    %v426 = vpop.permute.xlu0 %425
    %v428 = vadd.f32 %v418, %v426
    %v429 = vtanh.pop %v428
    %431 = vrot.lane.b32.xlu0 %v429, 64
    %v432 = vpop.permute.xlu0 %431
    %v434 = vmul.f32 %v415, %v432
    %436 = vrot.lane.b32.xlu0 %v434, 32
    %v437 = vpop.permute.xlu0 %436
    %439 = vst.msk [vmem:[#allocation3 + $0x8] sm:$0xff] %vm231, %v437
    %v440 = vld [vmem:[#allocation2 + $0x10] sm:$0xff]
    %v441 = vsel %vm231, %v437, 0
    %443 = vmatprep.subr.mxu0 0.0
    %444 = vmatpush1.msra.mxu0 %v226
    %445 = vmatprep.subr.mxu0 0.0
    %446 = vmatpush1.msra.mxu0 %v227
    %447 = vmatprep.subr.mxu0 0.0
    %448 = vmatpush1.msra.mxu0 %v228
    %449 = vmatprep.subr.mxu0 0.0
    %450 = vmatpush1.msra.mxu0 %v229
    %451 = vmatprep.subr.mxu0 0.0
    %452 = vmatpush1.msra.mxu0 0.0
    %453 = vmatprep.subr.mxu0 0.0
    %454 = vmatpush1.msra.mxu0 0.0
    %455 = vmatprep.subr.mxu0 0.0
    %456 = vmatpush1.msra.mxu0 0.0
    %457 = vmatprep.subr.mxu0 0.0
    %458 = vmatpush1.msra.mxu0 0.0
    %459 = vmatprep.subr.mxu0 0.0
    %460 = vmatpush1.msra.mxu0 0.0
    %461 = vmatprep.subr.mxu0 0.0
    %462 = vmatpush1.msra.mxu0 0.0
    %463 = vmatprep.subr.mxu0 0.0
    %464 = vmatpush1.msra.mxu0 0.0
    %465 = vmatprep.subr.mxu0 0.0
    %466 = vmatpush1.msra.mxu0 0.0
    %467 = vmatprep.subr.mxu0 0.0
    %468 = vmatpush1.msra.mxu0 0.0
    %469 = vmatprep.subr.mxu0 0.0
    %470 = vmatpush1.msra.mxu0 0.0
    %471 = vmatprep.subr.mxu0 0.0
    %472 = vmatpush1.msra.mxu0 0.0
    %473 = vmatprep.subr.mxu0 0.0
    %474 = vmatpush1.msra.mxu0 0.0
    %475 = vmatprep.subr.mxu0 0.0
    %476 = vmatpush1.msra.mxu0 0.0
    %477 = vmatprep.subr.mxu0 0.0
    %478 = vmatpush1.msra.mxu0 0.0
    %479 = vmatprep.subr.mxu0 0.0
    %480 = vmatpush1.msra.mxu0 0.0
    %481 = vmatprep.subr.mxu0 0.0
    %482 = vmatpush1.msra.mxu0 0.0
    %483 = vmatprep.subr.mxu0 0.0
    %484 = vmatpush1.msra.mxu0 0.0
    %485 = vmatprep.subr.mxu0 0.0
    %486 = vmatpush1.msra.mxu0 0.0
    %487 = vmatprep.subr.mxu0 0.0
    %488 = vmatpush1.msra.mxu0 0.0
    %489 = vmatprep.subr.mxu0 0.0
    %490 = vmatpush1.msra.mxu0 0.0
    %491 = vmatprep.subr.mxu0 0.0
    %492 = vmatpush1.msra.mxu0 0.0
    %493 = vmatprep.subr.mxu0 0.0
    %494 = vmatpush1.msra.mxu0 0.0
    %495 = vmatprep.subr.mxu0 0.0
    %496 = vmatpush1.msra.mxu0 0.0
    %497 = vmatprep.subr.mxu0 0.0
    %498 = vmatpush1.msra.mxu0 0.0
    %499 = vmatprep.subr.mxu0 0.0
    %500 = vmatpush1.msra.mxu0 0.0
    %501 = vmatprep.subr.mxu0 0.0
    %502 = vmatpush1.msra.mxu0 0.0
    %503 = vmatprep.subr.mxu0 0.0
    %504 = vmatpush1.msra.mxu0 0.0
    %505 = vmatprep.subr.mxu0 0.0
    %506 = vmatpush1.msra.mxu0 0.0
    %507 = vmatprep.mubr.f32.mxu0 0.0
    %508 = vmatmul.mubr.f32.gmra.mrb[0].mxu0 %v441
    %v509 = vpop.f32.mrb[0].mxu0
    %v510 = vadd.f32 0.0, %v509
    %v511 = vpop.f32.mrb[0].mxu0
    %512 = vdwg.mxu0
    %v513 = vadd.f32 %v440, %v510
    %v514 = vxor.u32 %v513, 2147483648
    %v515 = vmul.f32 %v514, 1.442695
    %v516 = vpow.pop %v515
    %v517 = vadd.f32 %v516, 1.0
    %v518 = vrcp.pop %v517
    %v519 = vmul.f32 1.0, %v518
    %v520 = vmul.f32 %v519, 2.0
    %v521 = vsub.f32 %v520, 1.0
    %v522 = vmul.f32 %v519, %v428
    %524 = vrot.lane.b32.xlu0 %v521, 64
    %v525 = vpop.permute.xlu0 %524
    %v527 = vmul.f32 %v519, %v525
    %529 = vrot.lane.b32.xlu0 %v527, 32
    %v530 = vpop.permute.xlu0 %529
    %v532 = vadd.f32 %v522, %v530
    %v533 = vtanh.pop %v532
    %535 = vrot.lane.b32.xlu0 %v533, 64
    %v536 = vpop.permute.xlu0 %535
    %v538 = vmul.f32 %v519, %v536
    %540 = vrot.lane.b32.xlu0 %v538, 32
    %v541 = vpop.permute.xlu0 %540
    %543 = vst.msk [vmem:[#allocation3 + $0x10] sm:$0xff] %vm231, %v541
    %v544 = vld [vmem:[#allocation2 + $0x18] sm:$0xff]
    %v545 = vsel %vm231, %v541, 0
    %547 = vmatprep.subr.mxu0 0.0
    %548 = vmatpush1.msra.mxu0 %v226
    %549 = vmatprep.subr.mxu0 0.0
    %550 = vmatpush1.msra.mxu0 %v227
    %551 = vmatprep.subr.mxu0 0.0
    %552 = vmatpush1.msra.mxu0 %v228
    %553 = vmatprep.subr.mxu0 0.0
    %554 = vmatpush1.msra.mxu0 %v229
    %555 = vmatprep.subr.mxu0 0.0
    %556 = vmatpush1.msra.mxu0 0.0
    %557 = vmatprep.subr.mxu0 0.0
    %558 = vmatpush1.msra.mxu0 0.0
    %559 = vmatprep.subr.mxu0 0.0
    %560 = vmatpush1.msra.mxu0 0.0
    %561 = vmatprep.subr.mxu0 0.0
    %562 = vmatpush1.msra.mxu0 0.0
    %563 = vmatprep.subr.mxu0 0.0
    %564 = vmatpush1.msra.mxu0 0.0
    %565 = vmatprep.subr.mxu0 0.0
    %566 = vmatpush1.msra.mxu0 0.0
    %567 = vmatprep.subr.mxu0 0.0
    %568 = vmatpush1.msra.mxu0 0.0
    %569 = vmatprep.subr.mxu0 0.0
    %570 = vmatpush1.msra.mxu0 0.0
    %571 = vmatprep.subr.mxu0 0.0
    %572 = vmatpush1.msra.mxu0 0.0
    %573 = vmatprep.subr.mxu0 0.0
    %574 = vmatpush1.msra.mxu0 0.0
    %575 = vmatprep.subr.mxu0 0.0
    %576 = vmatpush1.msra.mxu0 0.0
    %577 = vmatprep.subr.mxu0 0.0
    %578 = vmatpush1.msra.mxu0 0.0
    %579 = vmatprep.subr.mxu0 0.0
    %580 = vmatpush1.msra.mxu0 0.0
    %581 = vmatprep.subr.mxu0 0.0
    %582 = vmatpush1.msra.mxu0 0.0
    %583 = vmatprep.subr.mxu0 0.0
    %584 = vmatpush1.msra.mxu0 0.0
    %585 = vmatprep.subr.mxu0 0.0
    %586 = vmatpush1.msra.mxu0 0.0
    %587 = vmatprep.subr.mxu0 0.0
    %588 = vmatpush1.msra.mxu0 0.0
    %589 = vmatprep.subr.mxu0 0.0
    %590 = vmatpush1.msra.mxu0 0.0
    %591 = vmatprep.subr.mxu0 0.0
    %592 = vmatpush1.msra.mxu0 0.0
    %593 = vmatprep.subr.mxu0 0.0
    %594 = vmatpush1.msra.mxu0 0.0
    %595 = vmatprep.subr.mxu0 0.0
    %596 = vmatpush1.msra.mxu0 0.0
    %597 = vmatprep.subr.mxu0 0.0
    %598 = vmatpush1.msra.mxu0 0.0
    %599 = vmatprep.subr.mxu0 0.0
    %600 = vmatpush1.msra.mxu0 0.0
    %601 = vmatprep.subr.mxu0 0.0
    %602 = vmatpush1.msra.mxu0 0.0
    %603 = vmatprep.subr.mxu0 0.0
    %604 = vmatpush1.msra.mxu0 0.0
    %605 = vmatprep.subr.mxu0 0.0
    %606 = vmatpush1.msra.mxu0 0.0
    %607 = vmatprep.subr.mxu0 0.0
    %608 = vmatpush1.msra.mxu0 0.0
    %609 = vmatprep.subr.mxu0 0.0
    %610 = vmatpush1.msra.mxu0 0.0
    %611 = vmatprep.mubr.f32.mxu0 0.0
    %612 = vmatmul.mubr.f32.gmra.mrb[0].mxu0 %v545
    %v613 = vpop.f32.mrb[0].mxu0
    %v614 = vadd.f32 0.0, %v613
    %v615 = vpop.f32.mrb[0].mxu0
    %616 = vdwg.mxu0
    %v617 = vadd.f32 %v544, %v614
    %v618 = vxor.u32 %v617, 2147483648
    %v619 = vmul.f32 %v618, 1.442695
    %v620 = vpow.pop %v619
    %v621 = vadd.f32 %v620, 1.0
    %v622 = vrcp.pop %v621
    %v623 = vmul.f32 1.0, %v622
    %v624 = vmul.f32 %v623, 2.0
    %v625 = vsub.f32 %v624, 1.0
    %v626 = vmul.f32 %v623, %v532
    %628 = vrot.lane.b32.xlu0 %v625, 64
    %v629 = vpop.permute.xlu0 %628
    %v631 = vmul.f32 %v623, %v629
    %633 = vrot.lane.b32.xlu0 %v631, 32
    %v634 = vpop.permute.xlu0 %633
    %v636 = vadd.f32 %v626, %v634
    %v637 = vtanh.pop %v636
    %639 = vrot.lane.b32.xlu0 %v637, 64
    %v640 = vpop.permute.xlu0 %639
    %v642 = vmul.f32 %v623, %v640
    %644 = vrot.lane.b32.xlu0 %v642, 32
    %v645 = vpop.permute.xlu0 %644
    %647 = vst.msk [vmem:[#allocation3 + $0x18] sm:$0xff] %vm231, %v645
    %v648 = vld [vmem:[#allocation2 + $0x20] sm:$0xff]
    %v649 = vsel %vm231, %v645, 0
    %651 = vmatprep.subr.mxu0 0.0
    %652 = vmatpush1.msra.mxu0 %v226
    %653 = vmatprep.subr.mxu0 0.0
    %654 = vmatpush1.msra.mxu0 %v227
    %655 = vmatprep.subr.mxu0 0.0
    %656 = vmatpush1.msra.mxu0 %v228
    %657 = vmatprep.subr.mxu0 0.0
    %658 = vmatpush1.msra.mxu0 %v229
    %659 = vmatprep.subr.mxu0 0.0
    %660 = vmatpush1.msra.mxu0 0.0
    %661 = vmatprep.subr.mxu0 0.0
    %662 = vmatpush1.msra.mxu0 0.0
    %663 = vmatprep.subr.mxu0 0.0
    %664 = vmatpush1.msra.mxu0 0.0
    %665 = vmatprep.subr.mxu0 0.0
    %666 = vmatpush1.msra.mxu0 0.0
    %667 = vmatprep.subr.mxu0 0.0
    %668 = vmatpush1.msra.mxu0 0.0
    %669 = vmatprep.subr.mxu0 0.0
    %670 = vmatpush1.msra.mxu0 0.0
    %671 = vmatprep.subr.mxu0 0.0
    %672 = vmatpush1.msra.mxu0 0.0
    %673 = vmatprep.subr.mxu0 0.0
    %674 = vmatpush1.msra.mxu0 0.0
    %675 = vmatprep.subr.mxu0 0.0
    %676 = vmatpush1.msra.mxu0 0.0
    %677 = vmatprep.subr.mxu0 0.0
    %678 = vmatpush1.msra.mxu0 0.0
    %679 = vmatprep.subr.mxu0 0.0
    %680 = vmatpush1.msra.mxu0 0.0
    %681 = vmatprep.subr.mxu0 0.0
    %682 = vmatpush1.msra.mxu0 0.0
    %683 = vmatprep.subr.mxu0 0.0
    %684 = vmatpush1.msra.mxu0 0.0
    %685 = vmatprep.subr.mxu0 0.0
    %686 = vmatpush1.msra.mxu0 0.0
    %687 = vmatprep.subr.mxu0 0.0
    %688 = vmatpush1.msra.mxu0 0.0
    %689 = vmatprep.subr.mxu0 0.0
    %690 = vmatpush1.msra.mxu0 0.0
    %691 = vmatprep.subr.mxu0 0.0
    %692 = vmatpush1.msra.mxu0 0.0
    %693 = vmatprep.subr.mxu0 0.0
    %694 = vmatpush1.msra.mxu0 0.0
    %695 = vmatprep.subr.mxu0 0.0
    %696 = vmatpush1.msra.mxu0 0.0
    %697 = vmatprep.subr.mxu0 0.0
    %698 = vmatpush1.msra.mxu0 0.0
    %699 = vmatprep.subr.mxu0 0.0
    %700 = vmatpush1.msra.mxu0 0.0
    %701 = vmatprep.subr.mxu0 0.0
    %702 = vmatpush1.msra.mxu0 0.0
    %703 = vmatprep.subr.mxu0 0.0
    %704 = vmatpush1.msra.mxu0 0.0
    %705 = vmatprep.subr.mxu0 0.0
    %706 = vmatpush1.msra.mxu0 0.0
    %707 = vmatprep.subr.mxu0 0.0
    %708 = vmatpush1.msra.mxu0 0.0
    %709 = vmatprep.subr.mxu0 0.0
    %710 = vmatpush1.msra.mxu0 0.0
    %711 = vmatprep.subr.mxu0 0.0
    %712 = vmatpush1.msra.mxu0 0.0
    %713 = vmatprep.subr.mxu0 0.0
    %714 = vmatpush1.msra.mxu0 0.0
    %715 = vmatprep.mubr.f32.mxu0 0.0
    %716 = vmatmul.mubr.f32.gmra.mrb[0].mxu0 %v649
    %v717 = vpop.f32.mrb[0].mxu0
    %v718 = vadd.f32 0.0, %v717
    %v719 = vpop.f32.mrb[0].mxu0
    %720 = vdwg.mxu0
    %v721 = vadd.f32 %v648, %v718
    %v722 = vxor.u32 %v721, 2147483648
    %v723 = vmul.f32 %v722, 1.442695
    %v724 = vpow.pop %v723
    %v725 = vadd.f32 %v724, 1.0
    %v726 = vrcp.pop %v725
    %v727 = vmul.f32 1.0, %v726
    %v728 = vmul.f32 %v727, 2.0
    %v729 = vsub.f32 %v728, 1.0
    %v730 = vmul.f32 %v727, %v636
    %732 = vrot.lane.b32.xlu0 %v729, 64
    %v733 = vpop.permute.xlu0 %732
    %v735 = vmul.f32 %v727, %v733
    %737 = vrot.lane.b32.xlu0 %v735, 32
    %v738 = vpop.permute.xlu0 %737
    %v740 = vadd.f32 %v730, %v738
    %v741 = vtanh.pop %v740
    %743 = vrot.lane.b32.xlu0 %v741, 64
    %v744 = vpop.permute.xlu0 %743
    %v746 = vmul.f32 %v727, %v744
    %748 = vrot.lane.b32.xlu0 %v746, 32
    %v749 = vpop.permute.xlu0 %748
    %751 = vst.msk [vmem:[#allocation3 + $0x20] sm:$0xff] %vm231, %v749
    %v752 = vld [vmem:[#allocation2 + $0x28] sm:$0xff]
    %v753 = vsel %vm231, %v749, 0
    %755 = vmatprep.subr.mxu0 0.0
    %756 = vmatpush1.msra.mxu0 %v226
    %757 = vmatprep.subr.mxu0 0.0
    %758 = vmatpush1.msra.mxu0 %v227
    %759 = vmatprep.subr.mxu0 0.0
    %760 = vmatpush1.msra.mxu0 %v228
    %761 = vmatprep.subr.mxu0 0.0
    %762 = vmatpush1.msra.mxu0 %v229
    %763 = vmatprep.subr.mxu0 0.0
    %764 = vmatpush1.msra.mxu0 0.0
    %765 = vmatprep.subr.mxu0 0.0
    %766 = vmatpush1.msra.mxu0 0.0
    %767 = vmatprep.subr.mxu0 0.0
    %768 = vmatpush1.msra.mxu0 0.0
    %769 = vmatprep.subr.mxu0 0.0
    %770 = vmatpush1.msra.mxu0 0.0
    %771 = vmatprep.subr.mxu0 0.0
    %772 = vmatpush1.msra.mxu0 0.0
    %773 = vmatprep.subr.mxu0 0.0
    %774 = vmatpush1.msra.mxu0 0.0
    %775 = vmatprep.subr.mxu0 0.0
    %776 = vmatpush1.msra.mxu0 0.0
    %777 = vmatprep.subr.mxu0 0.0
    %778 = vmatpush1.msra.mxu0 0.0
    %779 = vmatprep.subr.mxu0 0.0
    %780 = vmatpush1.msra.mxu0 0.0
    %781 = vmatprep.subr.mxu0 0.0
    %782 = vmatpush1.msra.mxu0 0.0
    %783 = vmatprep.subr.mxu0 0.0
    %784 = vmatpush1.msra.mxu0 0.0
    %785 = vmatprep.subr.mxu0 0.0
    %786 = vmatpush1.msra.mxu0 0.0
    %787 = vmatprep.subr.mxu0 0.0
    %788 = vmatpush1.msra.mxu0 0.0
    %789 = vmatprep.subr.mxu0 0.0
    %790 = vmatpush1.msra.mxu0 0.0
    %791 = vmatprep.subr.mxu0 0.0
    %792 = vmatpush1.msra.mxu0 0.0
    %793 = vmatprep.subr.mxu0 0.0
    %794 = vmatpush1.msra.mxu0 0.0
    %795 = vmatprep.subr.mxu0 0.0
    %796 = vmatpush1.msra.mxu0 0.0
    %797 = vmatprep.subr.mxu0 0.0
    %798 = vmatpush1.msra.mxu0 0.0
    %799 = vmatprep.subr.mxu0 0.0
    %800 = vmatpush1.msra.mxu0 0.0
    %801 = vmatprep.subr.mxu0 0.0
    %802 = vmatpush1.msra.mxu0 0.0
    %803 = vmatprep.subr.mxu0 0.0
    %804 = vmatpush1.msra.mxu0 0.0
    %805 = vmatprep.subr.mxu0 0.0
    %806 = vmatpush1.msra.mxu0 0.0
    %807 = vmatprep.subr.mxu0 0.0
    %808 = vmatpush1.msra.mxu0 0.0
    %809 = vmatprep.subr.mxu0 0.0
    %810 = vmatpush1.msra.mxu0 0.0
    %811 = vmatprep.subr.mxu0 0.0
    %812 = vmatpush1.msra.mxu0 0.0
    %813 = vmatprep.subr.mxu0 0.0
    %814 = vmatpush1.msra.mxu0 0.0
    %815 = vmatprep.subr.mxu0 0.0
    %816 = vmatpush1.msra.mxu0 0.0
    %817 = vmatprep.subr.mxu0 0.0
    %818 = vmatpush1.msra.mxu0 0.0
    %819 = vmatprep.mubr.f32.mxu0 0.0
    %820 = vmatmul.mubr.f32.gmra.mrb[0].mxu0 %v753
    %v821 = vpop.f32.mrb[0].mxu0
    %v822 = vadd.f32 0.0, %v821
    %v823 = vpop.f32.mrb[0].mxu0
    %824 = vdwg.mxu0
    %v825 = vadd.f32 %v752, %v822
    %v826 = vxor.u32 %v825, 2147483648
    %v827 = vmul.f32 %v826, 1.442695
    %v828 = vpow.pop %v827
    %v829 = vadd.f32 %v828, 1.0
    %v830 = vrcp.pop %v829
    %v831 = vmul.f32 1.0, %v830
    %v832 = vmul.f32 %v831, 2.0
    %v833 = vsub.f32 %v832, 1.0
    %v834 = vmul.f32 %v831, %v740
    %836 = vrot.lane.b32.xlu0 %v833, 64
    %v837 = vpop.permute.xlu0 %836
    %v839 = vmul.f32 %v831, %v837
    %841 = vrot.lane.b32.xlu0 %v839, 32
    %v842 = vpop.permute.xlu0 %841
    %v844 = vadd.f32 %v834, %v842
    %v845 = vtanh.pop %v844
    %847 = vrot.lane.b32.xlu0 %v845, 64
    %v848 = vpop.permute.xlu0 %847
    %v850 = vmul.f32 %v831, %v848
    %852 = vrot.lane.b32.xlu0 %v850, 32
    %v853 = vpop.permute.xlu0 %852
    %855 = vst.msk [vmem:[#allocation3 + $0x28] sm:$0xff] %vm231, %v853
    %v856 = vld [vmem:[#allocation2 + $0x30] sm:$0xff]
    %v857 = vsel %vm231, %v853, 0
    %859 = vmatprep.subr.mxu0 0.0
    %860 = vmatpush1.msra.mxu0 %v226
    %861 = vmatprep.subr.mxu0 0.0
    %862 = vmatpush1.msra.mxu0 %v227
    %863 = vmatprep.subr.mxu0 0.0
    %864 = vmatpush1.msra.mxu0 %v228
    %865 = vmatprep.subr.mxu0 0.0
    %866 = vmatpush1.msra.mxu0 %v229
    %867 = vmatprep.subr.mxu0 0.0
    %868 = vmatpush1.msra.mxu0 0.0
    %869 = vmatprep.subr.mxu0 0.0
    %870 = vmatpush1.msra.mxu0 0.0
    %871 = vmatprep.subr.mxu0 0.0
    %872 = vmatpush1.msra.mxu0 0.0
    %873 = vmatprep.subr.mxu0 0.0
    %874 = vmatpush1.msra.mxu0 0.0
    %875 = vmatprep.subr.mxu0 0.0
    %876 = vmatpush1.msra.mxu0 0.0
    %877 = vmatprep.subr.mxu0 0.0
    %878 = vmatpush1.msra.mxu0 0.0
    %879 = vmatprep.subr.mxu0 0.0
    %880 = vmatpush1.msra.mxu0 0.0
    %881 = vmatprep.subr.mxu0 0.0
    %882 = vmatpush1.msra.mxu0 0.0
    %883 = vmatprep.subr.mxu0 0.0
    %884 = vmatpush1.msra.mxu0 0.0
    %885 = vmatprep.subr.mxu0 0.0
    %886 = vmatpush1.msra.mxu0 0.0
    %887 = vmatprep.subr.mxu0 0.0
    %888 = vmatpush1.msra.mxu0 0.0
    %889 = vmatprep.subr.mxu0 0.0
    %890 = vmatpush1.msra.mxu0 0.0
    %891 = vmatprep.subr.mxu0 0.0
    %892 = vmatpush1.msra.mxu0 0.0
    %893 = vmatprep.subr.mxu0 0.0
    %894 = vmatpush1.msra.mxu0 0.0
    %895 = vmatprep.subr.mxu0 0.0
    %896 = vmatpush1.msra.mxu0 0.0
    %897 = vmatprep.subr.mxu0 0.0
    %898 = vmatpush1.msra.mxu0 0.0
    %899 = vmatprep.subr.mxu0 0.0
    %900 = vmatpush1.msra.mxu0 0.0
    %901 = vmatprep.subr.mxu0 0.0
    %902 = vmatpush1.msra.mxu0 0.0
    %903 = vmatprep.subr.mxu0 0.0
    %904 = vmatpush1.msra.mxu0 0.0
    %905 = vmatprep.subr.mxu0 0.0
    %906 = vmatpush1.msra.mxu0 0.0
    %907 = vmatprep.subr.mxu0 0.0
    %908 = vmatpush1.msra.mxu0 0.0
    %909 = vmatprep.subr.mxu0 0.0
    %910 = vmatpush1.msra.mxu0 0.0
    %911 = vmatprep.subr.mxu0 0.0
    %912 = vmatpush1.msra.mxu0 0.0
    %913 = vmatprep.subr.mxu0 0.0
    %914 = vmatpush1.msra.mxu0 0.0
    %915 = vmatprep.subr.mxu0 0.0
    %916 = vmatpush1.msra.mxu0 0.0
    %917 = vmatprep.subr.mxu0 0.0
    %918 = vmatpush1.msra.mxu0 0.0
    %919 = vmatprep.subr.mxu0 0.0
    %920 = vmatpush1.msra.mxu0 0.0
    %921 = vmatprep.subr.mxu0 0.0
    %922 = vmatpush1.msra.mxu0 0.0
    %923 = vmatprep.mubr.f32.mxu0 0.0
    %924 = vmatmul.mubr.f32.gmra.mrb[0].mxu0 %v857
    %v925 = vpop.f32.mrb[0].mxu0
    %v926 = vadd.f32 0.0, %v925
    %v927 = vpop.f32.mrb[0].mxu0
    %928 = vdwg.mxu0
    %v929 = vadd.f32 %v856, %v926
    %v930 = vxor.u32 %v929, 2147483648
    %v931 = vmul.f32 %v930, 1.442695
    %v932 = vpow.pop %v931
    %v933 = vadd.f32 %v932, 1.0
    %v934 = vrcp.pop %v933
    %v935 = vmul.f32 1.0, %v934
    %v936 = vmul.f32 %v935, 2.0
    %v937 = vsub.f32 %v936, 1.0
    %v938 = vmul.f32 %v935, %v844
    %940 = vrot.lane.b32.xlu0 %v937, 64
    %v941 = vpop.permute.xlu0 %940
    %v943 = vmul.f32 %v935, %v941
    %945 = vrot.lane.b32.xlu0 %v943, 32
    %v946 = vpop.permute.xlu0 %945
    %v948 = vadd.f32 %v938, %v946
    %v949 = vtanh.pop %v948
    %951 = vrot.lane.b32.xlu0 %v949, 64
    %v952 = vpop.permute.xlu0 %951
    %v954 = vmul.f32 %v935, %v952
    %956 = vrot.lane.b32.xlu0 %v954, 32
    %v957 = vpop.permute.xlu0 %956
    %959 = vst.msk [vmem:[#allocation3 + $0x30] sm:$0xff] %vm231, %v957
    %v960 = vld [vmem:[#allocation2 + $0x38] sm:$0xff]
    %v961 = vsel %vm231, %v957, 0
    %963 = vmatprep.subr.mxu0 0.0
    %964 = vmatpush1.msra.mxu0 %v226
    %965 = vmatprep.subr.mxu0 0.0
    %966 = vmatpush1.msra.mxu0 %v227
    %967 = vmatprep.subr.mxu0 0.0
    %968 = vmatpush1.msra.mxu0 %v228
    %969 = vmatprep.subr.mxu0 0.0
    %970 = vmatpush1.msra.mxu0 %v229
    %971 = vmatprep.subr.mxu0 0.0
    %972 = vmatpush1.msra.mxu0 0.0
    %973 = vmatprep.subr.mxu0 0.0
    %974 = vmatpush1.msra.mxu0 0.0
    %975 = vmatprep.subr.mxu0 0.0
    %976 = vmatpush1.msra.mxu0 0.0
    %977 = vmatprep.subr.mxu0 0.0
    %978 = vmatpush1.msra.mxu0 0.0
    %979 = vmatprep.subr.mxu0 0.0
    %980 = vmatpush1.msra.mxu0 0.0
    %981 = vmatprep.subr.mxu0 0.0
    %982 = vmatpush1.msra.mxu0 0.0
    %983 = vmatprep.subr.mxu0 0.0
    %984 = vmatpush1.msra.mxu0 0.0
    %985 = vmatprep.subr.mxu0 0.0
    %986 = vmatpush1.msra.mxu0 0.0
    %987 = vmatprep.subr.mxu0 0.0
    %988 = vmatpush1.msra.mxu0 0.0
    %989 = vmatprep.subr.mxu0 0.0
    %990 = vmatpush1.msra.mxu0 0.0
    %991 = vmatprep.subr.mxu0 0.0
    %992 = vmatpush1.msra.mxu0 0.0
    %993 = vmatprep.subr.mxu0 0.0
    %994 = vmatpush1.msra.mxu0 0.0
    %995 = vmatprep.subr.mxu0 0.0
    %996 = vmatpush1.msra.mxu0 0.0
    %997 = vmatprep.subr.mxu0 0.0
    %998 = vmatpush1.msra.mxu0 0.0
    %999 = vmatprep.subr.mxu0 0.0
    %1000 = vmatpush1.msra.mxu0 0.0
    %1001 = vmatprep.subr.mxu0 0.0
    %1002 = vmatpush1.msra.mxu0 0.0
    %1003 = vmatprep.subr.mxu0 0.0
    %1004 = vmatpush1.msra.mxu0 0.0
    %1005 = vmatprep.subr.mxu0 0.0
    %1006 = vmatpush1.msra.mxu0 0.0
    %1007 = vmatprep.subr.mxu0 0.0
    %1008 = vmatpush1.msra.mxu0 0.0
    %1009 = vmatprep.subr.mxu0 0.0
    %1010 = vmatpush1.msra.mxu0 0.0
    %1011 = vmatprep.subr.mxu0 0.0
    %1012 = vmatpush1.msra.mxu0 0.0
    %1013 = vmatprep.subr.mxu0 0.0
    %1014 = vmatpush1.msra.mxu0 0.0
    %1015 = vmatprep.subr.mxu0 0.0
    %1016 = vmatpush1.msra.mxu0 0.0
    %1017 = vmatprep.subr.mxu0 0.0
    %1018 = vmatpush1.msra.mxu0 0.0
    %1019 = vmatprep.subr.mxu0 0.0
    %1020 = vmatpush1.msra.mxu0 0.0
    %1021 = vmatprep.subr.mxu0 0.0
    %1022 = vmatpush1.msra.mxu0 0.0
    %1023 = vmatprep.subr.mxu0 0.0
    %1024 = vmatpush1.msra.mxu0 0.0
    %1025 = vmatprep.subr.mxu0 0.0
    %1026 = vmatpush1.msra.mxu0 0.0
    %1027 = vmatprep.mubr.f32.mxu0 0.0
    %1028 = vmatmul.mubr.f32.gmra.mrb[0].mxu0 %v961
    %v1029 = vpop.f32.mrb[0].mxu0
    %v1030 = vadd.f32 0.0, %v1029
    %v1031 = vpop.f32.mrb[0].mxu0
    %1032 = vdwg.mxu0
    %v1033 = vadd.f32 %v960, %v1030
    %v1034 = vxor.u32 %v1033, 2147483648
    %v1035 = vmul.f32 %v1034, 1.442695
    %v1036 = vpow.pop %v1035
    %v1037 = vadd.f32 %v1036, 1.0
    %v1038 = vrcp.pop %v1037
    %v1039 = vmul.f32 1.0, %v1038
    %v1040 = vmul.f32 %v1039, 2.0
    %v1041 = vsub.f32 %v1040, 1.0
    %v1042 = vmul.f32 %v1039, %v948
    %1044 = vrot.lane.b32.xlu0 %v1041, 64
    %v1045 = vpop.permute.xlu0 %1044
    %v1047 = vmul.f32 %v1039, %v1045
    %1049 = vrot.lane.b32.xlu0 %v1047, 32
    %v1050 = vpop.permute.xlu0 %1049
    %v1052 = vadd.f32 %v1042, %v1050
    %v1053 = vtanh.pop %v1052
    %1055 = vrot.lane.b32.xlu0 %v1053, 64
    %v1056 = vpop.permute.xlu0 %1055
    %v1058 = vmul.f32 %v1039, %v1056
    %1060 = vrot.lane.b32.xlu0 %v1058, 32
    %v1061 = vpop.permute.xlu0 %1060
    %1063 = vst.msk [vmem:[#allocation3 + $0x38] sm:$0xff] %vm231, %v1061
    %v1064 = vld [vmem:[#allocation3] sm:$0xff]
    %v1065 = vld [vmem:[#allocation3 + $0x8] sm:$0xff]
    %v1066 = vld [vmem:[#allocation3 + $0x10] sm:$0xff]
    %v1067 = vld [vmem:[#allocation3 + $0x18] sm:$0xff]
    %v1068 = vld [vmem:[#allocation3 + $0x20] sm:$0xff]
    %v1069 = vld [vmem:[#allocation3 + $0x28] sm:$0xff]
    %v1070 = vld [vmem:[#allocation3 + $0x30] sm:$0xff]
    %v1071 = vld [vmem:[#allocation3 + $0x38] sm:$0xff]
    %v1072 = vld [vmem:[%s4] sm:$0xff]
    %v1073 = vld [vmem:[%s4 + $0x8] sm:$0xff]
    %v1074 = vld [vmem:[%s4 + $0x10] sm:$0xff]
    %v1075 = vld [vmem:[%s4 + $0x18] sm:$0xff]
    %v1076 = vld [vmem:[%s6] sm:$0x1]
    %v1078 = vlaneseq
    %v1079 = vshrl.u32 %v1078, 7
    %v1080 = vsub.s32 0, %v1079
    %v1081 = vrot.slane %v1076, %v1080
    %v1084 = vsel %vm231, %v1064, 0
    %v1087 = vsel %vm231, %v1065, 0
    %v1090 = vsel %vm231, %v1066, 0
    %v1093 = vsel %vm231, %v1067, 0
    %v1096 = vsel %vm231, %v1068, 0
    %v1099 = vsel %vm231, %v1069, 0
    %v1102 = vsel %vm231, %v1070, 0
    %v1105 = vsel %vm231, %v1071, 0
    %1107 = vmatprep.subr.mxu0 0.0
    %1108 = vmatpush1.msra.mxu0 %v1072
    %1109 = vmatprep.subr.mxu0 0.0
    %1110 = vmatpush1.msra.mxu0 %v1073
    %1111 = vmatprep.subr.mxu0 0.0
    %1112 = vmatpush1.msra.mxu0 %v1074
    %1113 = vmatprep.subr.mxu0 0.0
    %1114 = vmatpush1.msra.mxu0 %v1075
    %1115 = vmatprep.subr.mxu0 0.0
    %1116 = vmatpush1.msra.mxu0 0.0
    %1117 = vmatprep.subr.mxu0 0.0
    %1118 = vmatpush1.msra.mxu0 0.0
    %1119 = vmatprep.subr.mxu0 0.0
    %1120 = vmatpush1.msra.mxu0 0.0
    %1121 = vmatprep.subr.mxu0 0.0
    %1122 = vmatpush1.msra.mxu0 0.0
    %1123 = vmatprep.subr.mxu0 0.0
    %1124 = vmatpush1.msra.mxu0 0.0
    %1125 = vmatprep.subr.mxu0 0.0
    %1126 = vmatpush1.msra.mxu0 0.0
    %1127 = vmatprep.subr.mxu0 0.0
    %1128 = vmatpush1.msra.mxu0 0.0
    %1129 = vmatprep.subr.mxu0 0.0
    %1130 = vmatpush1.msra.mxu0 0.0
    %1131 = vmatprep.subr.mxu0 0.0
    %1132 = vmatpush1.msra.mxu0 0.0
    %1133 = vmatprep.subr.mxu0 0.0
    %1134 = vmatpush1.msra.mxu0 0.0
    %1135 = vmatprep.subr.mxu0 0.0
    %1136 = vmatpush1.msra.mxu0 0.0
    %1137 = vmatprep.subr.mxu0 0.0
    %1138 = vmatpush1.msra.mxu0 0.0
    %1139 = vmatprep.subr.mxu0 0.0
    %1140 = vmatpush1.msra.mxu0 0.0
    %1141 = vmatprep.subr.mxu0 0.0
    %1142 = vmatpush1.msra.mxu0 0.0
    %1143 = vmatprep.subr.mxu0 0.0
    %1144 = vmatpush1.msra.mxu0 0.0
    %1145 = vmatprep.subr.mxu0 0.0
    %1146 = vmatpush1.msra.mxu0 0.0
    %1147 = vmatprep.subr.mxu0 0.0
    %1148 = vmatpush1.msra.mxu0 0.0
    %1149 = vmatprep.subr.mxu0 0.0
    %1150 = vmatpush1.msra.mxu0 0.0
    %1151 = vmatprep.subr.mxu0 0.0
    %1152 = vmatpush1.msra.mxu0 0.0
    %1153 = vmatprep.subr.mxu0 0.0
    %1154 = vmatpush1.msra.mxu0 0.0
    %1155 = vmatprep.subr.mxu0 0.0
    %1156 = vmatpush1.msra.mxu0 0.0
    %1157 = vmatprep.subr.mxu0 0.0
    %1158 = vmatpush1.msra.mxu0 0.0
    %1159 = vmatprep.subr.mxu0 0.0
    %1160 = vmatpush1.msra.mxu0 0.0
    %1161 = vmatprep.subr.mxu0 0.0
    %1162 = vmatpush1.msra.mxu0 0.0
    %1163 = vmatprep.subr.mxu0 0.0
    %1164 = vmatpush1.msra.mxu0 0.0
    %1165 = vmatprep.subr.mxu0 0.0
    %1166 = vmatpush1.msra.mxu0 0.0
    %1167 = vmatprep.subr.mxu0 0.0
    %1168 = vmatpush1.msra.mxu0 0.0
    %1169 = vmatprep.subr.mxu0 0.0
    %1170 = vmatpush1.msra.mxu0 0.0
    %1171 = vmatprep.mubr.f32.mxu0 0.0
    %1172 = vmatmul.mubr.f32.gmra.mrb[0].mxu0 %v1084
    %v1173 = vpop.f32.mrb[0].mxu0
    %v1174 = vadd.f32 %v1081, %v1173
    %v1175 = vpop.f32.mrb[0].mxu0
    %1176 = vmatprep.mubr.f32.mxu0 0.0
    %1177 = vmatmul.mubr.f32.gmra.mrb[0].mxu0 %v1087
    %v1178 = vpop.f32.mrb[0].mxu0
    %v1179 = vadd.f32 %v1081, %v1178
    %v1180 = vpop.f32.mrb[0].mxu0
    %1181 = vmatprep.mubr.f32.mxu0 0.0
    %1182 = vmatmul.mubr.f32.gmra.mrb[0].mxu0 %v1090
    %v1183 = vpop.f32.mrb[0].mxu0
    %v1184 = vadd.f32 %v1081, %v1183
    %v1185 = vpop.f32.mrb[0].mxu0
    %1186 = vmatprep.mubr.f32.mxu0 0.0
    %1187 = vmatmul.mubr.f32.gmra.mrb[0].mxu0 %v1093
    %v1188 = vpop.f32.mrb[0].mxu0
    %v1189 = vadd.f32 %v1081, %v1188
    %v1190 = vpop.f32.mrb[0].mxu0
    %1191 = vmatprep.mubr.f32.mxu0 0.0
    %1192 = vmatmul.mubr.f32.gmra.mrb[0].mxu0 %v1096
    %v1193 = vpop.f32.mrb[0].mxu0
    %v1194 = vadd.f32 %v1081, %v1193
    %v1195 = vpop.f32.mrb[0].mxu0
    %1196 = vmatprep.mubr.f32.mxu0 0.0
    %1197 = vmatmul.mubr.f32.gmra.mrb[0].mxu0 %v1099
    %v1198 = vpop.f32.mrb[0].mxu0
    %v1199 = vadd.f32 %v1081, %v1198
    %v1200 = vpop.f32.mrb[0].mxu0
    %1201 = vmatprep.mubr.f32.mxu0 0.0
    %1202 = vmatmul.mubr.f32.gmra.mrb[0].mxu0 %v1102
    %v1203 = vpop.f32.mrb[0].mxu0
    %v1204 = vadd.f32 %v1081, %v1203
    %v1205 = vpop.f32.mrb[0].mxu0
    %1206 = vmatprep.mubr.f32.mxu0 0.0
    %1207 = vmatmul.mubr.f32.gmra.mrb[0].mxu0 %v1105
    %v1208 = vpop.f32.mrb[0].mxu0
    %v1209 = vadd.f32 %v1081, %v1208
    %v1210 = vpop.f32.mrb[0].mxu0
    %1211 = vdwg.mxu0
    %1212 = vst [vmem:[#allocation2] sm:$0xff] %v1174
    %1213 = vst [vmem:[#allocation2 + $0x8] sm:$0xff] %v1179
    %1214 = vst [vmem:[#allocation2 + $0x10] sm:$0xff] %v1184
    %1215 = vst [vmem:[#allocation2 + $0x18] sm:$0xff] %v1189
    %1216 = vst [vmem:[#allocation2 + $0x20] sm:$0xff] %v1194
    %1217 = vst [vmem:[#allocation2 + $0x28] sm:$0xff] %v1199
    %1218 = vst [vmem:[#allocation2 + $0x30] sm:$0xff] %v1204
    %1219 = vst [vmem:[#allocation2 + $0x38] sm:$0xff] %v1209
    %v1220 = vld [vmem:[%s5] sm:$0xff]
    %v1221 = vld [vmem:[%s5 + $0x8] sm:$0xff]
    %v1222 = vld [vmem:[%s5 + $0x10] sm:$0xff]
    %v1223 = vld [vmem:[%s5 + $0x18] sm:$0xff]
    %v1224 = vld [vmem:[#allocation2] sm:$0xff]
    %1225 = vmatprep.subr.mxu0 0.0
    %1226 = vmatpush1.msra.mxu0 %v1220
    %1227 = vmatprep.subr.mxu0 0.0
    %1228 = vmatpush1.msra.mxu0 %v1221
    %1229 = vmatprep.subr.mxu0 0.0
    %1230 = vmatpush1.msra.mxu0 %v1222
    %1231 = vmatprep.subr.mxu0 0.0
    %1232 = vmatpush1.msra.mxu0 %v1223
    %1233 = vmatprep.subr.mxu0 0.0
    %1234 = vmatpush1.msra.mxu0 0.0
    %1235 = vmatprep.subr.mxu0 0.0
    %1236 = vmatpush1.msra.mxu0 0.0
    %1237 = vmatprep.subr.mxu0 0.0
    %1238 = vmatpush1.msra.mxu0 0.0
    %1239 = vmatprep.subr.mxu0 0.0
    %1240 = vmatpush1.msra.mxu0 0.0
    %1241 = vmatprep.subr.mxu0 0.0
    %1242 = vmatpush1.msra.mxu0 0.0
    %1243 = vmatprep.subr.mxu0 0.0
    %1244 = vmatpush1.msra.mxu0 0.0
    %1245 = vmatprep.subr.mxu0 0.0
    %1246 = vmatpush1.msra.mxu0 0.0
    %1247 = vmatprep.subr.mxu0 0.0
    %1248 = vmatpush1.msra.mxu0 0.0
    %1249 = vmatprep.subr.mxu0 0.0
    %1250 = vmatpush1.msra.mxu0 0.0
    %1251 = vmatprep.subr.mxu0 0.0
    %1252 = vmatpush1.msra.mxu0 0.0
    %1253 = vmatprep.subr.mxu0 0.0
    %1254 = vmatpush1.msra.mxu0 0.0
    %1255 = vmatprep.subr.mxu0 0.0
    %1256 = vmatpush1.msra.mxu0 0.0
    %1257 = vmatprep.subr.mxu0 0.0
    %1258 = vmatpush1.msra.mxu0 0.0
    %1259 = vmatprep.subr.mxu0 0.0
    %1260 = vmatpush1.msra.mxu0 0.0
    %1261 = vmatprep.subr.mxu0 0.0
    %1262 = vmatpush1.msra.mxu0 0.0
    %1263 = vmatprep.subr.mxu0 0.0
    %1264 = vmatpush1.msra.mxu0 0.0
    %1265 = vmatprep.subr.mxu0 0.0
    %1266 = vmatpush1.msra.mxu0 0.0
    %1267 = vmatprep.subr.mxu0 0.0
    %1268 = vmatpush1.msra.mxu0 0.0
    %1269 = vmatprep.subr.mxu0 0.0
    %1270 = vmatpush1.msra.mxu0 0.0
    %1271 = vmatprep.subr.mxu0 0.0
    %1272 = vmatpush1.msra.mxu0 0.0
    %1273 = vmatprep.subr.mxu0 0.0
    %1274 = vmatpush1.msra.mxu0 0.0
    %1275 = vmatprep.subr.mxu0 0.0
    %1276 = vmatpush1.msra.mxu0 0.0
    %1277 = vmatprep.subr.mxu0 0.0
    %1278 = vmatpush1.msra.mxu0 0.0
    %1279 = vmatprep.subr.mxu0 0.0
    %1280 = vmatpush1.msra.mxu0 0.0
    %1281 = vmatprep.subr.mxu0 0.0
    %1282 = vmatpush1.msra.mxu0 0.0
    %1283 = vmatprep.subr.mxu0 0.0
    %1284 = vmatpush1.msra.mxu0 0.0
    %1285 = vmatprep.subr.mxu0 0.0
    %1286 = vmatpush1.msra.mxu0 0.0
    %1287 = vmatprep.subr.mxu0 0.0
    %1288 = vmatpush1.msra.mxu0 0.0
    %1289 = vmatprep.mubr.f32.mxu0 0.0
    %1290 = vmatmul.mubr.f32.gmra.mrb[0].mxu0 %v233
    %v1291 = vpop.f32.mrb[0].mxu0
    %v1292 = vadd.f32 0.0, %v1291
    %v1293 = vpop.f32.mrb[0].mxu0
    %1294 = vdwg.mxu0
    %v1295 = vadd.f32 %v1224, %v1292
    %v1296 = vxor.u32 %v1295, 2147483648
    %v1297 = vmul.f32 %v1296, 1.442695
    %v1298 = vpow.pop %v1297
    %v1299 = vadd.f32 %v1298, 1.0
    %v1300 = vrcp.pop %v1299
    %v1301 = vmul.f32 1.0, %v1300
    %v1302 = vmul.f32 %v1301, 2.0
    %v1303 = vsub.f32 %v1302, 1.0
    %v1304 = vmul.f32 %v1301, 0.0
    %1306 = vrot.lane.b32.xlu0 %v1303, 64
    %v1307 = vpop.permute.xlu0 %1306
    %v1309 = vmul.f32 %v1301, %v1307
    %1311 = vrot.lane.b32.xlu0 %v1309, 32
    %v1312 = vpop.permute.xlu0 %1311
    %v1314 = vadd.f32 %v1304, %v1312
    %v1315 = vtanh.pop %v1314
    %1317 = vrot.lane.b32.xlu0 %v1315, 64
    %v1318 = vpop.permute.xlu0 %1317
    %v1320 = vmul.f32 %v1301, %v1318
    %1322 = vrot.lane.b32.xlu0 %v1320, 32
    %v1323 = vpop.permute.xlu0 %1322
    %1325 = vst.msk [vmem:[#allocation3] sm:$0xff] %vm231, %v1323
    %v1326 = vld [vmem:[#allocation2 + $0x8] sm:$0xff]
    %v1327 = vsel %vm231, %v1323, 0
    %1329 = vmatprep.subr.mxu0 0.0
    %1330 = vmatpush1.msra.mxu0 %v1220
    %1331 = vmatprep.subr.mxu0 0.0
    %1332 = vmatpush1.msra.mxu0 %v1221
    %1333 = vmatprep.subr.mxu0 0.0
    %1334 = vmatpush1.msra.mxu0 %v1222
    %1335 = vmatprep.subr.mxu0 0.0
    %1336 = vmatpush1.msra.mxu0 %v1223
    %1337 = vmatprep.subr.mxu0 0.0
    %1338 = vmatpush1.msra.mxu0 0.0
    %1339 = vmatprep.subr.mxu0 0.0
    %1340 = vmatpush1.msra.mxu0 0.0
    %1341 = vmatprep.subr.mxu0 0.0
    %1342 = vmatpush1.msra.mxu0 0.0
    %1343 = vmatprep.subr.mxu0 0.0
    %1344 = vmatpush1.msra.mxu0 0.0
    %1345 = vmatprep.subr.mxu0 0.0
    %1346 = vmatpush1.msra.mxu0 0.0
    %1347 = vmatprep.subr.mxu0 0.0
    %1348 = vmatpush1.msra.mxu0 0.0
    %1349 = vmatprep.subr.mxu0 0.0
    %1350 = vmatpush1.msra.mxu0 0.0
    %1351 = vmatprep.subr.mxu0 0.0
    %1352 = vmatpush1.msra.mxu0 0.0
    %1353 = vmatprep.subr.mxu0 0.0
    %1354 = vmatpush1.msra.mxu0 0.0
    %1355 = vmatprep.subr.mxu0 0.0
    %1356 = vmatpush1.msra.mxu0 0.0
    %1357 = vmatprep.subr.mxu0 0.0
    %1358 = vmatpush1.msra.mxu0 0.0
    %1359 = vmatprep.subr.mxu0 0.0
    %1360 = vmatpush1.msra.mxu0 0.0
    %1361 = vmatprep.subr.mxu0 0.0
    %1362 = vmatpush1.msra.mxu0 0.0
    %1363 = vmatprep.subr.mxu0 0.0
    %1364 = vmatpush1.msra.mxu0 0.0
    %1365 = vmatprep.subr.mxu0 0.0
    %1366 = vmatpush1.msra.mxu0 0.0
    %1367 = vmatprep.subr.mxu0 0.0
    %1368 = vmatpush1.msra.mxu0 0.0
    %1369 = vmatprep.subr.mxu0 0.0
    %1370 = vmatpush1.msra.mxu0 0.0
    %1371 = vmatprep.subr.mxu0 0.0
    %1372 = vmatpush1.msra.mxu0 0.0
    %1373 = vmatprep.subr.mxu0 0.0
    %1374 = vmatpush1.msra.mxu0 0.0
    %1375 = vmatprep.subr.mxu0 0.0
    %1376 = vmatpush1.msra.mxu0 0.0
    %1377 = vmatprep.subr.mxu0 0.0
    %1378 = vmatpush1.msra.mxu0 0.0
    %1379 = vmatprep.subr.mxu0 0.0
    %1380 = vmatpush1.msra.mxu0 0.0
    %1381 = vmatprep.subr.mxu0 0.0
    %1382 = vmatpush1.msra.mxu0 0.0
    %1383 = vmatprep.subr.mxu0 0.0
    %1384 = vmatpush1.msra.mxu0 0.0
    %1385 = vmatprep.subr.mxu0 0.0
    %1386 = vmatpush1.msra.mxu0 0.0
    %1387 = vmatprep.subr.mxu0 0.0
    %1388 = vmatpush1.msra.mxu0 0.0
    %1389 = vmatprep.subr.mxu0 0.0
    %1390 = vmatpush1.msra.mxu0 0.0
    %1391 = vmatprep.subr.mxu0 0.0
    %1392 = vmatpush1.msra.mxu0 0.0
    %1393 = vmatprep.mubr.f32.mxu0 0.0
    %1394 = vmatmul.mubr.f32.gmra.mrb[0].mxu0 %v1327
    %v1395 = vpop.f32.mrb[0].mxu0
    %v1396 = vadd.f32 0.0, %v1395
    %v1397 = vpop.f32.mrb[0].mxu0
    %1398 = vdwg.mxu0
    %v1399 = vadd.f32 %v1326, %v1396
    %v1400 = vxor.u32 %v1399, 2147483648
    %v1401 = vmul.f32 %v1400, 1.442695
    %v1402 = vpow.pop %v1401
    %v1403 = vadd.f32 %v1402, 1.0
    %v1404 = vrcp.pop %v1403
    %v1405 = vmul.f32 1.0, %v1404
    %v1406 = vmul.f32 %v1405, 2.0
    %v1407 = vsub.f32 %v1406, 1.0
    %v1408 = vmul.f32 %v1405, %v1314
    %1410 = vrot.lane.b32.xlu0 %v1407, 64
    %v1411 = vpop.permute.xlu0 %1410
    %v1413 = vmul.f32 %v1405, %v1411
    %1415 = vrot.lane.b32.xlu0 %v1413, 32
    %v1416 = vpop.permute.xlu0 %1415
    %v1418 = vadd.f32 %v1408, %v1416
    %v1419 = vtanh.pop %v1418
    %1421 = vrot.lane.b32.xlu0 %v1419, 64
    %v1422 = vpop.permute.xlu0 %1421
    %v1424 = vmul.f32 %v1405, %v1422
    %1426 = vrot.lane.b32.xlu0 %v1424, 32
    %v1427 = vpop.permute.xlu0 %1426
    %1429 = vst.msk [vmem:[#allocation3 + $0x8] sm:$0xff] %vm231, %v1427
    %v1430 = vld [vmem:[#allocation2 + $0x10] sm:$0xff]
    %v1431 = vsel %vm231, %v1427, 0
    %1433 = vmatprep.subr.mxu0 0.0
    %1434 = vmatpush1.msra.mxu0 %v1220
    %1435 = vmatprep.subr.mxu0 0.0
    %1436 = vmatpush1.msra.mxu0 %v1221
    %1437 = vmatprep.subr.mxu0 0.0
    %1438 = vmatpush1.msra.mxu0 %v1222
    %1439 = vmatprep.subr.mxu0 0.0
    %1440 = vmatpush1.msra.mxu0 %v1223
    %1441 = vmatprep.subr.mxu0 0.0
    %1442 = vmatpush1.msra.mxu0 0.0
    %1443 = vmatprep.subr.mxu0 0.0
    %1444 = vmatpush1.msra.mxu0 0.0
    %1445 = vmatprep.subr.mxu0 0.0
    %1446 = vmatpush1.msra.mxu0 0.0
    %1447 = vmatprep.subr.mxu0 0.0
    %1448 = vmatpush1.msra.mxu0 0.0
    %1449 = vmatprep.subr.mxu0 0.0
    %1450 = vmatpush1.msra.mxu0 0.0
    %1451 = vmatprep.subr.mxu0 0.0
    %1452 = vmatpush1.msra.mxu0 0.0
    %1453 = vmatprep.subr.mxu0 0.0
    %1454 = vmatpush1.msra.mxu0 0.0
    %1455 = vmatprep.subr.mxu0 0.0
    %1456 = vmatpush1.msra.mxu0 0.0
    %1457 = vmatprep.subr.mxu0 0.0
    %1458 = vmatpush1.msra.mxu0 0.0
    %1459 = vmatprep.subr.mxu0 0.0
    %1460 = vmatpush1.msra.mxu0 0.0
    %1461 = vmatprep.subr.mxu0 0.0
    %1462 = vmatpush1.msra.mxu0 0.0
    %1463 = vmatprep.subr.mxu0 0.0
    %1464 = vmatpush1.msra.mxu0 0.0
    %1465 = vmatprep.subr.mxu0 0.0
    %1466 = vmatpush1.msra.mxu0 0.0
    %1467 = vmatprep.subr.mxu0 0.0
    %1468 = vmatpush1.msra.mxu0 0.0
    %1469 = vmatprep.subr.mxu0 0.0
    %1470 = vmatpush1.msra.mxu0 0.0
    %1471 = vmatprep.subr.mxu0 0.0
    %1472 = vmatpush1.msra.mxu0 0.0
    %1473 = vmatprep.subr.mxu0 0.0
    %1474 = vmatpush1.msra.mxu0 0.0
    %1475 = vmatprep.subr.mxu0 0.0
    %1476 = vmatpush1.msra.mxu0 0.0
    %1477 = vmatprep.subr.mxu0 0.0
    %1478 = vmatpush1.msra.mxu0 0.0
    %1479 = vmatprep.subr.mxu0 0.0
    %1480 = vmatpush1.msra.mxu0 0.0
    %1481 = vmatprep.subr.mxu0 0.0
    %1482 = vmatpush1.msra.mxu0 0.0
    %1483 = vmatprep.subr.mxu0 0.0
    %1484 = vmatpush1.msra.mxu0 0.0
    %1485 = vmatprep.subr.mxu0 0.0
    %1486 = vmatpush1.msra.mxu0 0.0
    %1487 = vmatprep.subr.mxu0 0.0
    %1488 = vmatpush1.msra.mxu0 0.0
    %1489 = vmatprep.subr.mxu0 0.0
    %1490 = vmatpush1.msra.mxu0 0.0
    %1491 = vmatprep.subr.mxu0 0.0
    %1492 = vmatpush1.msra.mxu0 0.0
    %1493 = vmatprep.subr.mxu0 0.0
    %1494 = vmatpush1.msra.mxu0 0.0
    %1495 = vmatprep.subr.mxu0 0.0
    %1496 = vmatpush1.msra.mxu0 0.0
    %1497 = vmatprep.mubr.f32.mxu0 0.0
    %1498 = vmatmul.mubr.f32.gmra.mrb[0].mxu0 %v1431
    %v1499 = vpop.f32.mrb[0].mxu0
    %v1500 = vadd.f32 0.0, %v1499
    %v1501 = vpop.f32.mrb[0].mxu0
    %1502 = vdwg.mxu0
    %v1503 = vadd.f32 %v1430, %v1500
    %v1504 = vxor.u32 %v1503, 2147483648
    %v1505 = vmul.f32 %v1504, 1.442695
    %v1506 = vpow.pop %v1505
    %v1507 = vadd.f32 %v1506, 1.0
    %v1508 = vrcp.pop %v1507
    %v1509 = vmul.f32 1.0, %v1508
    %v1510 = vmul.f32 %v1509, 2.0
    %v1511 = vsub.f32 %v1510, 1.0
    %v1512 = vmul.f32 %v1509, %v1418
    %1514 = vrot.lane.b32.xlu0 %v1511, 64
    %v1515 = vpop.permute.xlu0 %1514
    %v1517 = vmul.f32 %v1509, %v1515
    %1519 = vrot.lane.b32.xlu0 %v1517, 32
    %v1520 = vpop.permute.xlu0 %1519
    %v1522 = vadd.f32 %v1512, %v1520
    %v1523 = vtanh.pop %v1522
    %1525 = vrot.lane.b32.xlu0 %v1523, 64
    %v1526 = vpop.permute.xlu0 %1525
    %v1528 = vmul.f32 %v1509, %v1526
    %1530 = vrot.lane.b32.xlu0 %v1528, 32
    %v1531 = vpop.permute.xlu0 %1530
    %1533 = vst.msk [vmem:[#allocation3 + $0x10] sm:$0xff] %vm231, %v1531
    %v1534 = vld [vmem:[#allocation2 + $0x18] sm:$0xff]
    %v1535 = vsel %vm231, %v1531, 0
    %1537 = vmatprep.subr.mxu0 0.0
    %1538 = vmatpush1.msra.mxu0 %v1220
    %1539 = vmatprep.subr.mxu0 0.0
    %1540 = vmatpush1.msra.mxu0 %v1221
    %1541 = vmatprep.subr.mxu0 0.0
    %1542 = vmatpush1.msra.mxu0 %v1222
    %1543 = vmatprep.subr.mxu0 0.0
    %1544 = vmatpush1.msra.mxu0 %v1223
    %1545 = vmatprep.subr.mxu0 0.0
    %1546 = vmatpush1.msra.mxu0 0.0
    %1547 = vmatprep.subr.mxu0 0.0
    %1548 = vmatpush1.msra.mxu0 0.0
    %1549 = vmatprep.subr.mxu0 0.0
    %1550 = vmatpush1.msra.mxu0 0.0
    %1551 = vmatprep.subr.mxu0 0.0
    %1552 = vmatpush1.msra.mxu0 0.0
    %1553 = vmatprep.subr.mxu0 0.0
    %1554 = vmatpush1.msra.mxu0 0.0
    %1555 = vmatprep.subr.mxu0 0.0
    %1556 = vmatpush1.msra.mxu0 0.0
    %1557 = vmatprep.subr.mxu0 0.0
    %1558 = vmatpush1.msra.mxu0 0.0
    %1559 = vmatprep.subr.mxu0 0.0
    %1560 = vmatpush1.msra.mxu0 0.0
    %1561 = vmatprep.subr.mxu0 0.0
    %1562 = vmatpush1.msra.mxu0 0.0
    %1563 = vmatprep.subr.mxu0 0.0
    %1564 = vmatpush1.msra.mxu0 0.0
    %1565 = vmatprep.subr.mxu0 0.0
    %1566 = vmatpush1.msra.mxu0 0.0
    %1567 = vmatprep.subr.mxu0 0.0
    %1568 = vmatpush1.msra.mxu0 0.0
    %1569 = vmatprep.subr.mxu0 0.0
    %1570 = vmatpush1.msra.mxu0 0.0
    %1571 = vmatprep.subr.mxu0 0.0
    %1572 = vmatpush1.msra.mxu0 0.0
    %1573 = vmatprep.subr.mxu0 0.0
    %1574 = vmatpush1.msra.mxu0 0.0
    %1575 = vmatprep.subr.mxu0 0.0
    %1576 = vmatpush1.msra.mxu0 0.0
    %1577 = vmatprep.subr.mxu0 0.0
    %1578 = vmatpush1.msra.mxu0 0.0
    %1579 = vmatprep.subr.mxu0 0.0
    %1580 = vmatpush1.msra.mxu0 0.0
    %1581 = vmatprep.subr.mxu0 0.0
    %1582 = vmatpush1.msra.mxu0 0.0
    %1583 = vmatprep.subr.mxu0 0.0
    %1584 = vmatpush1.msra.mxu0 0.0
    %1585 = vmatprep.subr.mxu0 0.0
    %1586 = vmatpush1.msra.mxu0 0.0
    %1587 = vmatprep.subr.mxu0 0.0
    %1588 = vmatpush1.msra.mxu0 0.0
    %1589 = vmatprep.subr.mxu0 0.0
    %1590 = vmatpush1.msra.mxu0 0.0
    %1591 = vmatprep.subr.mxu0 0.0
    %1592 = vmatpush1.msra.mxu0 0.0
    %1593 = vmatprep.subr.mxu0 0.0
    %1594 = vmatpush1.msra.mxu0 0.0
    %1595 = vmatprep.subr.mxu0 0.0
    %1596 = vmatpush1.msra.mxu0 0.0
    %1597 = vmatprep.subr.mxu0 0.0
    %1598 = vmatpush1.msra.mxu0 0.0
    %1599 = vmatprep.subr.mxu0 0.0
    %1600 = vmatpush1.msra.mxu0 0.0
    %1601 = vmatprep.mubr.f32.mxu0 0.0
    %1602 = vmatmul.mubr.f32.gmra.mrb[0].mxu0 %v1535
    %v1603 = vpop.f32.mrb[0].mxu0
    %v1604 = vadd.f32 0.0, %v1603
    %v1605 = vpop.f32.mrb[0].mxu0
    %1606 = vdwg.mxu0
    %v1607 = vadd.f32 %v1534, %v1604
    %v1608 = vxor.u32 %v1607, 2147483648
    %v1609 = vmul.f32 %v1608, 1.442695
    %v1610 = vpow.pop %v1609
    %v1611 = vadd.f32 %v1610, 1.0
    %v1612 = vrcp.pop %v1611
    %v1613 = vmul.f32 1.0, %v1612
    %v1614 = vmul.f32 %v1613, 2.0
    %v1615 = vsub.f32 %v1614, 1.0
    %v1616 = vmul.f32 %v1613, %v1522
    %1618 = vrot.lane.b32.xlu0 %v1615, 64
    %v1619 = vpop.permute.xlu0 %1618
    %v1621 = vmul.f32 %v1613, %v1619
    %1623 = vrot.lane.b32.xlu0 %v1621, 32
    %v1624 = vpop.permute.xlu0 %1623
    %v1626 = vadd.f32 %v1616, %v1624
    %v1627 = vtanh.pop %v1626
    %1629 = vrot.lane.b32.xlu0 %v1627, 64
    %v1630 = vpop.permute.xlu0 %1629
    %v1632 = vmul.f32 %v1613, %v1630
    %1634 = vrot.lane.b32.xlu0 %v1632, 32
    %v1635 = vpop.permute.xlu0 %1634
    %1637 = vst.msk [vmem:[#allocation3 + $0x18] sm:$0xff] %vm231, %v1635
    %v1638 = vld [vmem:[#allocation2 + $0x20] sm:$0xff]
    %v1639 = vsel %vm231, %v1635, 0
    %1641 = vmatprep.subr.mxu0 0.0
    %1642 = vmatpush1.msra.mxu0 %v1220
    %1643 = vmatprep.subr.mxu0 0.0
    %1644 = vmatpush1.msra.mxu0 %v1221
    %1645 = vmatprep.subr.mxu0 0.0
    %1646 = vmatpush1.msra.mxu0 %v1222
    %1647 = vmatprep.subr.mxu0 0.0
    %1648 = vmatpush1.msra.mxu0 %v1223
    %1649 = vmatprep.subr.mxu0 0.0
    %1650 = vmatpush1.msra.mxu0 0.0
    %1651 = vmatprep.subr.mxu0 0.0
    %1652 = vmatpush1.msra.mxu0 0.0
    %1653 = vmatprep.subr.mxu0 0.0
    %1654 = vmatpush1.msra.mxu0 0.0
    %1655 = vmatprep.subr.mxu0 0.0
    %1656 = vmatpush1.msra.mxu0 0.0
    %1657 = vmatprep.subr.mxu0 0.0
    %1658 = vmatpush1.msra.mxu0 0.0
    %1659 = vmatprep.subr.mxu0 0.0
    %1660 = vmatpush1.msra.mxu0 0.0
    %1661 = vmatprep.subr.mxu0 0.0
    %1662 = vmatpush1.msra.mxu0 0.0
    %1663 = vmatprep.subr.mxu0 0.0
    %1664 = vmatpush1.msra.mxu0 0.0
    %1665 = vmatprep.subr.mxu0 0.0
    %1666 = vmatpush1.msra.mxu0 0.0
    %1667 = vmatprep.subr.mxu0 0.0
    %1668 = vmatpush1.msra.mxu0 0.0
    %1669 = vmatprep.subr.mxu0 0.0
    %1670 = vmatpush1.msra.mxu0 0.0
    %1671 = vmatprep.subr.mxu0 0.0
    %1672 = vmatpush1.msra.mxu0 0.0
    %1673 = vmatprep.subr.mxu0 0.0
    %1674 = vmatpush1.msra.mxu0 0.0
    %1675 = vmatprep.subr.mxu0 0.0
    %1676 = vmatpush1.msra.mxu0 0.0
    %1677 = vmatprep.subr.mxu0 0.0
    %1678 = vmatpush1.msra.mxu0 0.0
    %1679 = vmatprep.subr.mxu0 0.0
    %1680 = vmatpush1.msra.mxu0 0.0
    %1681 = vmatprep.subr.mxu0 0.0
    %1682 = vmatpush1.msra.mxu0 0.0
    %1683 = vmatprep.subr.mxu0 0.0
    %1684 = vmatpush1.msra.mxu0 0.0
    %1685 = vmatprep.subr.mxu0 0.0
    %1686 = vmatpush1.msra.mxu0 0.0
    %1687 = vmatprep.subr.mxu0 0.0
    %1688 = vmatpush1.msra.mxu0 0.0
    %1689 = vmatprep.subr.mxu0 0.0
    %1690 = vmatpush1.msra.mxu0 0.0
    %1691 = vmatprep.subr.mxu0 0.0
    %1692 = vmatpush1.msra.mxu0 0.0
    %1693 = vmatprep.subr.mxu0 0.0
    %1694 = vmatpush1.msra.mxu0 0.0
    %1695 = vmatprep.subr.mxu0 0.0
    %1696 = vmatpush1.msra.mxu0 0.0
    %1697 = vmatprep.subr.mxu0 0.0
    %1698 = vmatpush1.msra.mxu0 0.0
    %1699 = vmatprep.subr.mxu0 0.0
    %1700 = vmatpush1.msra.mxu0 0.0
    %1701 = vmatprep.subr.mxu0 0.0
    %1702 = vmatpush1.msra.mxu0 0.0
    %1703 = vmatprep.subr.mxu0 0.0
    %1704 = vmatpush1.msra.mxu0 0.0
    %1705 = vmatprep.mubr.f32.mxu0 0.0
    %1706 = vmatmul.mubr.f32.gmra.mrb[0].mxu0 %v1639
    %v1707 = vpop.f32.mrb[0].mxu0
    %v1708 = vadd.f32 0.0, %v1707
    %v1709 = vpop.f32.mrb[0].mxu0
    %1710 = vdwg.mxu0
    %v1711 = vadd.f32 %v1638, %v1708
    %v1712 = vxor.u32 %v1711, 2147483648
    %v1713 = vmul.f32 %v1712, 1.442695
    %v1714 = vpow.pop %v1713
    %v1715 = vadd.f32 %v1714, 1.0
    %v1716 = vrcp.pop %v1715
    %v1717 = vmul.f32 1.0, %v1716
    %v1718 = vmul.f32 %v1717, 2.0
    %v1719 = vsub.f32 %v1718, 1.0
    %v1720 = vmul.f32 %v1717, %v1626
    %1722 = vrot.lane.b32.xlu0 %v1719, 64
    %v1723 = vpop.permute.xlu0 %1722
    %v1725 = vmul.f32 %v1717, %v1723
    %1727 = vrot.lane.b32.xlu0 %v1725, 32
    %v1728 = vpop.permute.xlu0 %1727
    %v1730 = vadd.f32 %v1720, %v1728
    %v1731 = vtanh.pop %v1730
    %1733 = vrot.lane.b32.xlu0 %v1731, 64
    %v1734 = vpop.permute.xlu0 %1733
    %v1736 = vmul.f32 %v1717, %v1734
    %1738 = vrot.lane.b32.xlu0 %v1736, 32
    %v1739 = vpop.permute.xlu0 %1738
    %1741 = vst.msk [vmem:[#allocation3 + $0x20] sm:$0xff] %vm231, %v1739
    %v1742 = vld [vmem:[#allocation2 + $0x28] sm:$0xff]
    %v1743 = vsel %vm231, %v1739, 0
    %1745 = vmatprep.subr.mxu0 0.0
    %1746 = vmatpush1.msra.mxu0 %v1220
    %1747 = vmatprep.subr.mxu0 0.0
    %1748 = vmatpush1.msra.mxu0 %v1221
    %1749 = vmatprep.subr.mxu0 0.0
    %1750 = vmatpush1.msra.mxu0 %v1222
    %1751 = vmatprep.subr.mxu0 0.0
    %1752 = vmatpush1.msra.mxu0 %v1223
    %1753 = vmatprep.subr.mxu0 0.0
    %1754 = vmatpush1.msra.mxu0 0.0
    %1755 = vmatprep.subr.mxu0 0.0
    %1756 = vmatpush1.msra.mxu0 0.0
    %1757 = vmatprep.subr.mxu0 0.0
    %1758 = vmatpush1.msra.mxu0 0.0
    %1759 = vmatprep.subr.mxu0 0.0
    %1760 = vmatpush1.msra.mxu0 0.0
    %1761 = vmatprep.subr.mxu0 0.0
    %1762 = vmatpush1.msra.mxu0 0.0
    %1763 = vmatprep.subr.mxu0 0.0
    %1764 = vmatpush1.msra.mxu0 0.0
    %1765 = vmatprep.subr.mxu0 0.0
    %1766 = vmatpush1.msra.mxu0 0.0
    %1767 = vmatprep.subr.mxu0 0.0
    %1768 = vmatpush1.msra.mxu0 0.0
    %1769 = vmatprep.subr.mxu0 0.0
    %1770 = vmatpush1.msra.mxu0 0.0
    %1771 = vmatprep.subr.mxu0 0.0
    %1772 = vmatpush1.msra.mxu0 0.0
    %1773 = vmatprep.subr.mxu0 0.0
    %1774 = vmatpush1.msra.mxu0 0.0
    %1775 = vmatprep.subr.mxu0 0.0
    %1776 = vmatpush1.msra.mxu0 0.0
    %1777 = vmatprep.subr.mxu0 0.0
    %1778 = vmatpush1.msra.mxu0 0.0
    %1779 = vmatprep.subr.mxu0 0.0
    %1780 = vmatpush1.msra.mxu0 0.0
    %1781 = vmatprep.subr.mxu0 0.0
    %1782 = vmatpush1.msra.mxu0 0.0
    %1783 = vmatprep.subr.mxu0 0.0
    %1784 = vmatpush1.msra.mxu0 0.0
    %1785 = vmatprep.subr.mxu0 0.0
    %1786 = vmatpush1.msra.mxu0 0.0
    %1787 = vmatprep.subr.mxu0 0.0
    %1788 = vmatpush1.msra.mxu0 0.0
    %1789 = vmatprep.subr.mxu0 0.0
    %1790 = vmatpush1.msra.mxu0 0.0
    %1791 = vmatprep.subr.mxu0 0.0
    %1792 = vmatpush1.msra.mxu0 0.0
    %1793 = vmatprep.subr.mxu0 0.0
    %1794 = vmatpush1.msra.mxu0 0.0
    %1795 = vmatprep.subr.mxu0 0.0
    %1796 = vmatpush1.msra.mxu0 0.0
    %1797 = vmatprep.subr.mxu0 0.0
    %1798 = vmatpush1.msra.mxu0 0.0
    %1799 = vmatprep.subr.mxu0 0.0
    %1800 = vmatpush1.msra.mxu0 0.0
    %1801 = vmatprep.subr.mxu0 0.0
    %1802 = vmatpush1.msra.mxu0 0.0
    %1803 = vmatprep.subr.mxu0 0.0
    %1804 = vmatpush1.msra.mxu0 0.0
    %1805 = vmatprep.subr.mxu0 0.0
    %1806 = vmatpush1.msra.mxu0 0.0
    %1807 = vmatprep.subr.mxu0 0.0
    %1808 = vmatpush1.msra.mxu0 0.0
    %1809 = vmatprep.mubr.f32.mxu0 0.0
    %1810 = vmatmul.mubr.f32.gmra.mrb[0].mxu0 %v1743
    %v1811 = vpop.f32.mrb[0].mxu0
    %v1812 = vadd.f32 0.0, %v1811
    %v1813 = vpop.f32.mrb[0].mxu0
    %1814 = vdwg.mxu0
    %v1815 = vadd.f32 %v1742, %v1812
    %v1816 = vxor.u32 %v1815, 2147483648
    %v1817 = vmul.f32 %v1816, 1.442695
    %v1818 = vpow.pop %v1817
    %v1819 = vadd.f32 %v1818, 1.0
    %v1820 = vrcp.pop %v1819
    %v1821 = vmul.f32 1.0, %v1820
    %v1822 = vmul.f32 %v1821, 2.0
    %v1823 = vsub.f32 %v1822, 1.0
    %v1824 = vmul.f32 %v1821, %v1730
    %1826 = vrot.lane.b32.xlu0 %v1823, 64
    %v1827 = vpop.permute.xlu0 %1826
    %v1829 = vmul.f32 %v1821, %v1827
    %1831 = vrot.lane.b32.xlu0 %v1829, 32
    %v1832 = vpop.permute.xlu0 %1831
    %v1834 = vadd.f32 %v1824, %v1832
    %v1835 = vtanh.pop %v1834
    %1837 = vrot.lane.b32.xlu0 %v1835, 64
    %v1838 = vpop.permute.xlu0 %1837
    %v1840 = vmul.f32 %v1821, %v1838
    %1842 = vrot.lane.b32.xlu0 %v1840, 32
    %v1843 = vpop.permute.xlu0 %1842
    %1845 = vst.msk [vmem:[#allocation3 + $0x28] sm:$0xff] %vm231, %v1843
    %v1846 = vld [vmem:[#allocation2 + $0x30] sm:$0xff]
    %v1847 = vsel %vm231, %v1843, 0
    %1849 = vmatprep.subr.mxu0 0.0
    %1850 = vmatpush1.msra.mxu0 %v1220
    %1851 = vmatprep.subr.mxu0 0.0
    %1852 = vmatpush1.msra.mxu0 %v1221
    %1853 = vmatprep.subr.mxu0 0.0
    %1854 = vmatpush1.msra.mxu0 %v1222
    %1855 = vmatprep.subr.mxu0 0.0
    %1856 = vmatpush1.msra.mxu0 %v1223
    %1857 = vmatprep.subr.mxu0 0.0
    %1858 = vmatpush1.msra.mxu0 0.0
    %1859 = vmatprep.subr.mxu0 0.0
    %1860 = vmatpush1.msra.mxu0 0.0
    %1861 = vmatprep.subr.mxu0 0.0
    %1862 = vmatpush1.msra.mxu0 0.0
    %1863 = vmatprep.subr.mxu0 0.0
    %1864 = vmatpush1.msra.mxu0 0.0
    %1865 = vmatprep.subr.mxu0 0.0
    %1866 = vmatpush1.msra.mxu0 0.0
    %1867 = vmatprep.subr.mxu0 0.0
    %1868 = vmatpush1.msra.mxu0 0.0
    %1869 = vmatprep.subr.mxu0 0.0
    %1870 = vmatpush1.msra.mxu0 0.0
    %1871 = vmatprep.subr.mxu0 0.0
    %1872 = vmatpush1.msra.mxu0 0.0
    %1873 = vmatprep.subr.mxu0 0.0
    %1874 = vmatpush1.msra.mxu0 0.0
    %1875 = vmatprep.subr.mxu0 0.0
    %1876 = vmatpush1.msra.mxu0 0.0
    %1877 = vmatprep.subr.mxu0 0.0
    %1878 = vmatpush1.msra.mxu0 0.0
    %1879 = vmatprep.subr.mxu0 0.0
    %1880 = vmatpush1.msra.mxu0 0.0
    %1881 = vmatprep.subr.mxu0 0.0
    %1882 = vmatpush1.msra.mxu0 0.0
    %1883 = vmatprep.subr.mxu0 0.0
    %1884 = vmatpush1.msra.mxu0 0.0
    %1885 = vmatprep.subr.mxu0 0.0
    %1886 = vmatpush1.msra.mxu0 0.0
    %1887 = vmatprep.subr.mxu0 0.0
    %1888 = vmatpush1.msra.mxu0 0.0
    %1889 = vmatprep.subr.mxu0 0.0
    %1890 = vmatpush1.msra.mxu0 0.0
    %1891 = vmatprep.subr.mxu0 0.0
    %1892 = vmatpush1.msra.mxu0 0.0
    %1893 = vmatprep.subr.mxu0 0.0
    %1894 = vmatpush1.msra.mxu0 0.0
    %1895 = vmatprep.subr.mxu0 0.0
    %1896 = vmatpush1.msra.mxu0 0.0
    %1897 = vmatprep.subr.mxu0 0.0
    %1898 = vmatpush1.msra.mxu0 0.0
    %1899 = vmatprep.subr.mxu0 0.0
    %1900 = vmatpush1.msra.mxu0 0.0
    %1901 = vmatprep.subr.mxu0 0.0
    %1902 = vmatpush1.msra.mxu0 0.0
    %1903 = vmatprep.subr.mxu0 0.0
    %1904 = vmatpush1.msra.mxu0 0.0
    %1905 = vmatprep.subr.mxu0 0.0
    %1906 = vmatpush1.msra.mxu0 0.0
    %1907 = vmatprep.subr.mxu0 0.0
    %1908 = vmatpush1.msra.mxu0 0.0
    %1909 = vmatprep.subr.mxu0 0.0
    %1910 = vmatpush1.msra.mxu0 0.0
    %1911 = vmatprep.subr.mxu0 0.0
    %1912 = vmatpush1.msra.mxu0 0.0
    %1913 = vmatprep.mubr.f32.mxu0 0.0
    %1914 = vmatmul.mubr.f32.gmra.mrb[0].mxu0 %v1847
    %v1915 = vpop.f32.mrb[0].mxu0
    %v1916 = vadd.f32 0.0, %v1915
    %v1917 = vpop.f32.mrb[0].mxu0
    %1918 = vdwg.mxu0
    %v1919 = vadd.f32 %v1846, %v1916
    %v1920 = vxor.u32 %v1919, 2147483648
    %v1921 = vmul.f32 %v1920, 1.442695
    %v1922 = vpow.pop %v1921
    %v1923 = vadd.f32 %v1922, 1.0
    %v1924 = vrcp.pop %v1923
    %v1925 = vmul.f32 1.0, %v1924
    %v1926 = vmul.f32 %v1925, 2.0
    %v1927 = vsub.f32 %v1926, 1.0
    %v1928 = vmul.f32 %v1925, %v1834
    %1930 = vrot.lane.b32.xlu0 %v1927, 64
    %v1931 = vpop.permute.xlu0 %1930
    %v1933 = vmul.f32 %v1925, %v1931
    %1935 = vrot.lane.b32.xlu0 %v1933, 32
    %v1936 = vpop.permute.xlu0 %1935
    %v1938 = vadd.f32 %v1928, %v1936
    %v1939 = vtanh.pop %v1938
    %1941 = vrot.lane.b32.xlu0 %v1939, 64
    %v1942 = vpop.permute.xlu0 %1941
    %v1944 = vmul.f32 %v1925, %v1942
    %1946 = vrot.lane.b32.xlu0 %v1944, 32
    %v1947 = vpop.permute.xlu0 %1946
    %1949 = vst.msk [vmem:[#allocation3 + $0x30] sm:$0xff] %vm231, %v1947
    %v1950 = vld [vmem:[#allocation2 + $0x38] sm:$0xff]
    %v1951 = vsel %vm231, %v1947, 0
    %1953 = vmatprep.subr.mxu0 0.0
    %1954 = vmatpush1.msra.mxu0 %v1220
    %1955 = vmatprep.subr.mxu0 0.0
    %1956 = vmatpush1.msra.mxu0 %v1221
    %1957 = vmatprep.subr.mxu0 0.0
    %1958 = vmatpush1.msra.mxu0 %v1222
    %1959 = vmatprep.subr.mxu0 0.0
    %1960 = vmatpush1.msra.mxu0 %v1223
    %1961 = vmatprep.subr.mxu0 0.0
    %1962 = vmatpush1.msra.mxu0 0.0
    %1963 = vmatprep.subr.mxu0 0.0
    %1964 = vmatpush1.msra.mxu0 0.0
    %1965 = vmatprep.subr.mxu0 0.0
    %1966 = vmatpush1.msra.mxu0 0.0
    %1967 = vmatprep.subr.mxu0 0.0
    %1968 = vmatpush1.msra.mxu0 0.0
    %1969 = vmatprep.subr.mxu0 0.0
    %1970 = vmatpush1.msra.mxu0 0.0
    %1971 = vmatprep.subr.mxu0 0.0
    %1972 = vmatpush1.msra.mxu0 0.0
    %1973 = vmatprep.subr.mxu0 0.0
    %1974 = vmatpush1.msra.mxu0 0.0
    %1975 = vmatprep.subr.mxu0 0.0
    %1976 = vmatpush1.msra.mxu0 0.0
    %1977 = vmatprep.subr.mxu0 0.0
    %1978 = vmatpush1.msra.mxu0 0.0
    %1979 = vmatprep.subr.mxu0 0.0
    %1980 = vmatpush1.msra.mxu0 0.0
    %1981 = vmatprep.subr.mxu0 0.0
    %1982 = vmatpush1.msra.mxu0 0.0
    %1983 = vmatprep.subr.mxu0 0.0
    %1984 = vmatpush1.msra.mxu0 0.0
    %1985 = vmatprep.subr.mxu0 0.0
    %1986 = vmatpush1.msra.mxu0 0.0
    %1987 = vmatprep.subr.mxu0 0.0
    %1988 = vmatpush1.msra.mxu0 0.0
    %1989 = vmatprep.subr.mxu0 0.0
    %1990 = vmatpush1.msra.mxu0 0.0
    %1991 = vmatprep.subr.mxu0 0.0
    %1992 = vmatpush1.msra.mxu0 0.0
    %1993 = vmatprep.subr.mxu0 0.0
    %1994 = vmatpush1.msra.mxu0 0.0
    %1995 = vmatprep.subr.mxu0 0.0
    %1996 = vmatpush1.msra.mxu0 0.0
    %1997 = vmatprep.subr.mxu0 0.0
    %1998 = vmatpush1.msra.mxu0 0.0
    %1999 = vmatprep.subr.mxu0 0.0
    %2000 = vmatpush1.msra.mxu0 0.0
    %2001 = vmatprep.subr.mxu0 0.0
    %2002 = vmatpush1.msra.mxu0 0.0
    %2003 = vmatprep.subr.mxu0 0.0
    %2004 = vmatpush1.msra.mxu0 0.0
    %2005 = vmatprep.subr.mxu0 0.0
    %2006 = vmatpush1.msra.mxu0 0.0
    %2007 = vmatprep.subr.mxu0 0.0
    %2008 = vmatpush1.msra.mxu0 0.0
    %2009 = vmatprep.subr.mxu0 0.0
    %2010 = vmatpush1.msra.mxu0 0.0
    %2011 = vmatprep.subr.mxu0 0.0
    %2012 = vmatpush1.msra.mxu0 0.0
    %2013 = vmatprep.subr.mxu0 0.0
    %2014 = vmatpush1.msra.mxu0 0.0
    %2015 = vmatprep.subr.mxu0 0.0
    %2016 = vmatpush1.msra.mxu0 0.0
    %2017 = vmatprep.mubr.f32.mxu0 0.0
    %2018 = vmatmul.mubr.f32.gmra.mrb[0].mxu0 %v1951
    %v2019 = vpop.f32.mrb[0].mxu0
    %v2020 = vadd.f32 0.0, %v2019
    %v2021 = vpop.f32.mrb[0].mxu0
    %2022 = vdwg.mxu0
    %v2023 = vadd.f32 %v1950, %v2020
    %v2024 = vxor.u32 %v2023, 2147483648
    %v2025 = vmul.f32 %v2024, 1.442695
    %v2026 = vpow.pop %v2025
    %v2027 = vadd.f32 %v2026, 1.0
    %v2028 = vrcp.pop %v2027
    %v2029 = vmul.f32 1.0, %v2028
    %v2030 = vmul.f32 %v2029, 2.0
    %v2031 = vsub.f32 %v2030, 1.0
    %v2032 = vmul.f32 %v2029, %v1938
    %2034 = vrot.lane.b32.xlu0 %v2031, 64
    %v2035 = vpop.permute.xlu0 %2034
    %v2037 = vmul.f32 %v2029, %v2035
    %2039 = vrot.lane.b32.xlu0 %v2037, 32
    %v2040 = vpop.permute.xlu0 %2039
    %v2042 = vadd.f32 %v2032, %v2040
    %v2043 = vtanh.pop %v2042
    %2045 = vrot.lane.b32.xlu0 %v2043, 64
    %v2046 = vpop.permute.xlu0 %2045
    %v2048 = vmul.f32 %v2029, %v2046
    %2050 = vrot.lane.b32.xlu0 %v2048, 32
    %v2051 = vpop.permute.xlu0 %2050
    %2053 = vst.msk [vmem:[#allocation3 + $0x38] sm:$0xff] %vm231, %v2051
    %v2054 = vld [vmem:[#allocation3] sm:$0xff]
    %v2055 = vld [vmem:[#allocation3 + $0x8] sm:$0xff]
    %v2056 = vld [vmem:[#allocation3 + $0x10] sm:$0xff]
    %v2057 = vld [vmem:[#allocation3 + $0x18] sm:$0xff]
    %v2058 = vld [vmem:[#allocation3 + $0x20] sm:$0xff]
    %v2059 = vld [vmem:[#allocation3 + $0x28] sm:$0xff]
    %v2060 = vld [vmem:[#allocation3 + $0x30] sm:$0xff]
    %v2061 = vld [vmem:[#allocation3 + $0x38] sm:$0xff]
    %v2062 = vmax.f32 %v2054, 0.0
    %v2063 = vmax.f32 %v2055, 0.0
    %v2064 = vmax.f32 %v2056, 0.0
    %v2065 = vmax.f32 %v2057, 0.0
    %v2066 = vmax.f32 %v2058, 0.0
    %v2067 = vmax.f32 %v2059, 0.0
    %v2068 = vmax.f32 %v2060, 0.0
    %v2069 = vmax.f32 %v2061, 0.0
    %v2070 = vld [vmem:[#allocation6] sm:$0xff]
    %v2071 = vld [vmem:[#allocation6 + $0x8] sm:$0xff]
    %v2072 = vld [vmem:[#allocation6 + $0x10] sm:$0xff]
    %v2073 = vld [vmem:[#allocation6 + $0x18] sm:$0xff]
    %v2074 = vld [vmem:[#allocation8] sm:$0x1]
    %v2076 = vlaneseq
    %v2077 = vshrl.u32 %v2076, 7
    %v2078 = vsub.s32 0, %v2077
    %v2079 = vrot.slane %v2074, %v2078
    %v2082 = vsel %vm231, %v2062, 0
    %v2085 = vsel %vm231, %v2063, 0
    %v2088 = vsel %vm231, %v2064, 0
    %v2091 = vsel %vm231, %v2065, 0
    %v2094 = vsel %vm231, %v2066, 0
    %v2097 = vsel %vm231, %v2067, 0
    %v2100 = vsel %vm231, %v2068, 0
    %v2103 = vsel %vm231, %v2069, 0
    %2105 = vmatprep.subr.mxu0 0.0
    %2106 = vmatpush1.msra.mxu0 %v2070
    %2107 = vmatprep.subr.mxu0 0.0
    %2108 = vmatpush1.msra.mxu0 %v2071
    %2109 = vmatprep.subr.mxu0 0.0
    %2110 = vmatpush1.msra.mxu0 %v2072
    %2111 = vmatprep.subr.mxu0 0.0
    %2112 = vmatpush1.msra.mxu0 %v2073
    %2113 = vmatprep.subr.mxu0 0.0
    %2114 = vmatpush1.msra.mxu0 0.0
    %2115 = vmatprep.subr.mxu0 0.0
    %2116 = vmatpush1.msra.mxu0 0.0
    %2117 = vmatprep.subr.mxu0 0.0
    %2118 = vmatpush1.msra.mxu0 0.0
    %2119 = vmatprep.subr.mxu0 0.0
    %2120 = vmatpush1.msra.mxu0 0.0
    %2121 = vmatprep.subr.mxu0 0.0
    %2122 = vmatpush1.msra.mxu0 0.0
    %2123 = vmatprep.subr.mxu0 0.0
    %2124 = vmatpush1.msra.mxu0 0.0
    %2125 = vmatprep.subr.mxu0 0.0
    %2126 = vmatpush1.msra.mxu0 0.0
    %2127 = vmatprep.subr.mxu0 0.0
    %2128 = vmatpush1.msra.mxu0 0.0
    %2129 = vmatprep.subr.mxu0 0.0
    %2130 = vmatpush1.msra.mxu0 0.0
    %2131 = vmatprep.subr.mxu0 0.0
    %2132 = vmatpush1.msra.mxu0 0.0
    %2133 = vmatprep.subr.mxu0 0.0
    %2134 = vmatpush1.msra.mxu0 0.0
    %2135 = vmatprep.subr.mxu0 0.0
    %2136 = vmatpush1.msra.mxu0 0.0
    %2137 = vmatprep.subr.mxu0 0.0
    %2138 = vmatpush1.msra.mxu0 0.0
    %2139 = vmatprep.subr.mxu0 0.0
    %2140 = vmatpush1.msra.mxu0 0.0
    %2141 = vmatprep.subr.mxu0 0.0
    %2142 = vmatpush1.msra.mxu0 0.0
    %2143 = vmatprep.subr.mxu0 0.0
    %2144 = vmatpush1.msra.mxu0 0.0
    %2145 = vmatprep.subr.mxu0 0.0
    %2146 = vmatpush1.msra.mxu0 0.0
    %2147 = vmatprep.subr.mxu0 0.0
    %2148 = vmatpush1.msra.mxu0 0.0
    %2149 = vmatprep.subr.mxu0 0.0
    %2150 = vmatpush1.msra.mxu0 0.0
    %2151 = vmatprep.subr.mxu0 0.0
    %2152 = vmatpush1.msra.mxu0 0.0
    %2153 = vmatprep.subr.mxu0 0.0
    %2154 = vmatpush1.msra.mxu0 0.0
    %2155 = vmatprep.subr.mxu0 0.0
    %2156 = vmatpush1.msra.mxu0 0.0
    %2157 = vmatprep.subr.mxu0 0.0
    %2158 = vmatpush1.msra.mxu0 0.0
    %2159 = vmatprep.subr.mxu0 0.0
    %2160 = vmatpush1.msra.mxu0 0.0
    %2161 = vmatprep.subr.mxu0 0.0
    %2162 = vmatpush1.msra.mxu0 0.0
    %2163 = vmatprep.subr.mxu0 0.0
    %2164 = vmatpush1.msra.mxu0 0.0
    %2165 = vmatprep.subr.mxu0 0.0
    %2166 = vmatpush1.msra.mxu0 0.0
    %2167 = vmatprep.subr.mxu0 0.0
    %2168 = vmatpush1.msra.mxu0 0.0
    %2169 = vmatprep.mubr.f32.mxu0 0.0
    %2170 = vmatmul.mubr.f32.gmra.mrb[0].mxu0 %v2082
    %v2171 = vpop.f32.mrb[0].mxu0
    %v2172 = vadd.f32 %v2079, %v2171
    %v2173 = vpop.f32.mrb[0].mxu0
    %2174 = vmatprep.mubr.f32.mxu0 0.0
    %2175 = vmatmul.mubr.f32.gmra.mrb[0].mxu0 %v2085
    %v2176 = vpop.f32.mrb[0].mxu0
    %v2177 = vadd.f32 %v2079, %v2176
    %v2178 = vpop.f32.mrb[0].mxu0
    %2179 = vmatprep.mubr.f32.mxu0 0.0
    %2180 = vmatmul.mubr.f32.gmra.mrb[0].mxu0 %v2088
    %v2181 = vpop.f32.mrb[0].mxu0
    %v2182 = vadd.f32 %v2079, %v2181
    %v2183 = vpop.f32.mrb[0].mxu0
    %2184 = vmatprep.mubr.f32.mxu0 0.0
    %2185 = vmatmul.mubr.f32.gmra.mrb[0].mxu0 %v2091
    %v2186 = vpop.f32.mrb[0].mxu0
    %v2187 = vadd.f32 %v2079, %v2186
    %v2188 = vpop.f32.mrb[0].mxu0
    %2189 = vmatprep.mubr.f32.mxu0 0.0
    %2190 = vmatmul.mubr.f32.gmra.mrb[0].mxu0 %v2094
    %v2191 = vpop.f32.mrb[0].mxu0
    %v2192 = vadd.f32 %v2079, %v2191
    %v2193 = vpop.f32.mrb[0].mxu0
    %2194 = vmatprep.mubr.f32.mxu0 0.0
    %2195 = vmatmul.mubr.f32.gmra.mrb[0].mxu0 %v2097
    %v2196 = vpop.f32.mrb[0].mxu0
    %v2197 = vadd.f32 %v2079, %v2196
    %v2198 = vpop.f32.mrb[0].mxu0
    %2199 = vmatprep.mubr.f32.mxu0 0.0
    %2200 = vmatmul.mubr.f32.gmra.mrb[0].mxu0 %v2100
    %v2201 = vpop.f32.mrb[0].mxu0
    %v2202 = vadd.f32 %v2079, %v2201
    %v2203 = vpop.f32.mrb[0].mxu0
    %2204 = vmatprep.mubr.f32.mxu0 0.0
    %2205 = vmatmul.mubr.f32.gmra.mrb[0].mxu0 %v2103
    %v2206 = vpop.f32.mrb[0].mxu0
    %v2207 = vadd.f32 %v2079, %v2206
    %v2208 = vpop.f32.mrb[0].mxu0
    %2209 = vdwg.mxu0
    %2210 = vst [vmem:[%s9] sm:$0xff] %v2172
    %2211 = vst [vmem:[%s9 + $0x8] sm:$0xff] %v2177
    %2212 = vst [vmem:[%s9 + $0x10] sm:$0xff] %v2182
    %2213 = vst [vmem:[%s9 + $0x18] sm:$0xff] %v2187
    %2214 = vst [vmem:[%s9 + $0x20] sm:$0xff] %v2192
    %2215 = vst [vmem:[%s9 + $0x28] sm:$0xff] %v2197
    %2216 = vst [vmem:[%s9 + $0x30] sm:$0xff] %v2202
    %2217 = vst [vmem:[%s9 + $0x38] sm:$0xff] %v2207
    // Predicated region
    $region50: #{lstm_model.1} parent=1 // pred_check
      _
    $region51: #{lstm_model.1} parent=1 // pred_check_branch
      %2219 = sbr.rel (0) target = $region53
    $region52: #{lstm_model.1} parent=1 // pred_region
      _
    $region53: #{lstm_model.1} parent=1 // pred_fallthru
      _
    // Predicated region
    $region54: #{lstm_model.1} parent=1 // pred_check
      _
    $region55: #{lstm_model.1} parent=1 // pred_check_branch
      %2221 = sbr.rel (0) target = $region57
    $region56: #{lstm_model.1} parent=1 // pred_region
      _
    $region57: #{lstm_model.1} parent=1 // pred_fallthru
      _
    %2222 = vsyncpa [#allocation5], 1
    %2223 = vsyncpa [#allocation7], 1

</llo_original>
